<compile_context>
chip_gen: v6e
topology: v6e:2x2x1
jax: 0.10.0
libtpu: 0.0.40
codegen_flags: <defaults>
</compile_context>

<pallas_src>
import numpy as np
import jax
import jax.numpy as jnp
from jax.experimental import pallas as pl
from jax.experimental.pallas import tpu as pltpu

# ----------------------------- config ---------------------------------------
IN_CHANNELS = 512     # ROI feature dim
POOLING_DIM = 512     # union feature dim
MLP_DIM     = 256     # self.mlp_dim (2048 in the real model; small here)
EMBED_DIM   = 128     # GloVe embedding dim
NUM_OBJ_CLS = 32      # object classes (incl. background)
NUM_REL_CLS = 16      # relation classes
LN_EPS      = 1e-5    # torch nn.LayerNorm default eps
NORM_EPS    = 1e-12   # eps for L2 normalization (torch clamps ||x|| at eps;
                      # only near-zero / padded rows differ, and those are
                      # sliced off before return)
TILE        = 128     # row tile (MXU-aligned)
PROTO_PAD   = 128     # lane-dense logits: prototypes padded to 128 rows
CDT         = jnp.bfloat16        # matmul operand / activation dtype
_VMEM_LIMIT = 32 * 1024 * 1024    # explicit scoped-VMEM budget (fits all gens)


# ------------------- shared math (used by kernels AND reference) ------------
def _mm(x, w):
    """MXU matmul: bf16 operands, f32 accumulation."""
    return jnp.dot(x.astype(CDT), w.astype(CDT),
                   preferred_element_type=jnp.float32)


def _mlp2(x, w1, b1, w2, b2):
    """Linear -> ReLU -> Linear (Dropout = identity in eval)."""
    return _mm(jnp.maximum(_mm(x, w1) + b1, 0.0), w2) + b2


def _add_layernorm(h, x, gamma, beta):
    y = h + x
    mu = jnp.mean(y, axis=-1, keepdims=True)
    c = y - mu
    var = jnp.mean(c * c, axis=-1, keepdims=True)
    return c * jax.lax.rsqrt(var + LN_EPS) * gamma + beta


def _l2_normalize(x):
    return x * jax.lax.rsqrt(jnp.sum(x * x, axis=-1, keepdims=True) + NORM_EPS)


def _entity_math(roi, w, b):
    y = _mm(roi, w) + b                        # (rows, 2*MLP_DIM)
    # torch: entity_rep.view(N, 2, mlp)[:, 0] -> obj_rep, [:, 1] -> sub_rep
    return y[:, :MLP_DIM], y[:, MLP_DIM:]


def _proto_math(rel_emb, scale, w):
    (wp1, bp1, wp2, bp2, wh1, bh1, wh2, bh2) = w   # W_pred, project_head
    proto = _mlp2(rel_emb, wp1, bp1, wp2, bp2)
    proto = _mlp2(jnp.maximum(proto, 0.0), wh1, bh1, wh2, bh2)
    return _l2_normalize(proto) * scale            # fold exp(logit_scale) here


def _relation_math(s_emb, o_emb, s_vis, o_vis, u, proto_t, w):
    """Fused subject/object + predicate branches -> cosine logits."""
    (ws1, bs1, ws2, bs2,            # W_sub
     wo1, bo1, wo2, bo2,            # W_obj
     wv1, bv1, wv2, bv2,            # vis2sem (shared)
     gs_wa, gs_wb, gs_b,            # gate_sub (pre-split K-halves)
     go_wa, go_wb, go_b,            # gate_obj
     wls, bls, wlo, blo,            # linear_sub / linear_obj
     gns, bns, gno, bno,            # norm_sub / norm_obj
     wd1, bd1, wd2, bd2,            # down_samp
     gp_wa, gp_wb, gp_b,            # gate_pred (pre-split K-halves)
     wlr, blr, gnr, bnr,            # linear_rel_rep / norm_rel_rep
     wh1, bh1, wh2, bh2) = w        # project_head
    rows = s_emb.shape[0]

    s_embed = _mlp2(s_emb, ws1, bs1, ws2, bs2)
    o_embed = _mlp2(o_emb, wo1, bo1, wo2, bo2)

    # shared vis2sem run once over row-stacked (s_vis | o_vis | down_samp(u))
    dsamp = _mlp2(u, wd1, bd1, wd2, bd2)
    stacked = jnp.concatenate(
        [s_vis.astype(CDT), o_vis.astype(CDT), dsamp.astype(CDT)], axis=0)
    sem = _mlp2(stacked, wv1, bv1, wv2, bv2)
    sem_sub, sem_obj, sem_pred = sem[:rows], sem[rows:2 * rows], sem[2 * rows:]

    # sigmoid(cat(a, b) @ Wg) == sigmoid(a @ Wg[:K] + b @ Wg[K:])
    gate_s = jax.nn.sigmoid(_mm(s_embed, gs_wa) + _mm(sem_sub, gs_wb) + gs_b)
    gate_o = jax.nn.sigmoid(_mm(o_embed, go_wa) + _mm(sem_obj, go_wb) + go_b)
    sub = s_embed + sem_sub * gate_s
    obj = o_embed + sem_obj * gate_o
    sub = _add_layernorm(jnp.maximum(_mm(sub, wls) + bls, 0.0), sub, gns, bns)
    obj = _add_layernorm(jnp.maximum(_mm(obj, wlo) + blo, 0.0), obj, gno, bno)
    # fusion_func(x, y) = relu(x + y) - (x - y)**2
    dso = sub - obj
    fso = jnp.maximum(sub + obj, 0.0) - dso * dso

    gate_p = jax.nn.sigmoid(_mm(fso, gp_wa) + _mm(sem_pred, gp_wb) + gp_b)
    rel = fso - sem_pred * gate_p
    rel = _add_layernorm(jnp.maximum(_mm(rel, wlr) + blr, 0.0), rel, gnr, bnr)
    rel = _mlp2(jnp.maximum(rel, 0.0), wh1, bh1, wh2, bh2)
    rn = _l2_normalize(rel)
    # cosine logits vs pre-scaled, pre-transposed bf16 prototypes (lane-dense)
    return _mm(rn, proto_t)


# ----------------------------- pallas kernels -------------------------------
def _entity_kernel(x_ref, w_ref, b_ref, obj_ref, sub_ref):
    obj, sub = _entity_math(x_ref[...], w_ref[...], b_ref[...])
    obj_ref[...] = obj.astype(obj_ref.dtype)
    sub_ref[...] = sub.astype(sub_ref.dtype)


def _proto_kernel(*refs):
    emb_ref, scale_ref = refs[0], refs[1]
    w = tuple(r[...] for r in refs[2:-1])
    refs[-1][...] = _proto_math(emb_ref[...], scale_ref[0], w)


def _relation_kernel(*refs):
    s_emb, o_emb, s_vis, o_vis, u, proto_t = (r[...] for r in refs[:6])
    w = tuple(r[...] for r in refs[6:-1])
    refs[-1][...] = _relation_math(s_emb, o_emb, s_vis, o_vis, u, proto_t, w)


# ----------------------------- pallas wrappers ------------------------------
def _round_up(n, m):
    return ((n + m - 1) // m) * m


def _pad_rows(x, rows):
    return x if x.shape[0] == rows else jnp.pad(x, ((0, rows - x.shape[0]), (0, 0)))


def _row_spec(cols):
    return pl.BlockSpec((TILE, cols), lambda i: (i, 0))


# invariant weights/biases: single resident copy in VMEM, no pipeline buffers
_VMEM = pl.BlockSpec(memory_space=pltpu.MemorySpace.VMEM)
_SMEM = pl.BlockSpec(memory_space=pltpu.MemorySpace.SMEM)


def pallas_entity(roi, post_emb):
    w, b = post_emb
    n_pad = _round_up(roi.shape[0], TILE)
    roi_p = _pad_rows(roi, n_pad)
    obj_rep, sub_rep = pl.pallas_call(
        _entity_kernel,
        out_shape=(jax.ShapeDtypeStruct((n_pad, MLP_DIM), CDT),
                   jax.ShapeDtypeStruct((n_pad, MLP_DIM), CDT)),
        grid=(n_pad // TILE,),
        in_specs=[_row_spec(IN_CHANNELS), _VMEM, _VMEM],
        out_specs=(_row_spec(MLP_DIM), _row_spec(MLP_DIM)),
        compiler_params=pltpu.CompilerParams(
            dimension_semantics=("parallel",), vmem_limit_bytes=_VMEM_LIMIT),
    )(roi_p, w, b)
    return obj_rep, sub_rep          # padded rows; callers gather with ids < N


def pallas_proto_branch(rel_emb, scale, weights):
    emb_p = _pad_rows(rel_emb, PROTO_PAD)       # lane-dense logits downstream
    proto = pl.pallas_call(
        _proto_kernel,
        out_shape=jax.ShapeDtypeStruct((PROTO_PAD, 2 * MLP_DIM), jnp.float32),
        in_specs=[_VMEM, _SMEM] + [_VMEM] * len(weights),
        compiler_params=pltpu.CompilerParams(vmem_limit_bytes=_VMEM_LIMIT),
    )(emb_p, scale.reshape(1), *weights)
    # prototypes are eval-time constants (computed once, hoisted out of the
    # per-forward path), so the transpose + bf16 cast are done once XLA-side;
    # the relation kernel then gets a pre-transposed, pre-scaled bf16 RHS.
    return proto.T.astype(CDT)                  # (2*MLP_DIM, PROTO_PAD)


def pallas_relation(s_emb, o_emb, s_vis, o_vis, union, proto_t, weights):
    r_pad = _round_up(s_emb.shape[0], TILE)
    data = [_pad_rows(a, r_pad) for a in (s_emb, o_emb, s_vis, o_vis, union)]
    n_cols = proto_t.shape[1]
    return pl.pallas_call(
        _relation_kernel,
        out_shape=jax.ShapeDtypeStruct((r_pad, n_cols), jnp.float32),
        grid=(r_pad // TILE,),
        in_specs=[_row_spec(a.shape[1]) for a in data]
                 + [_VMEM] * (1 + len(weights)),
        out_specs=_row_spec(n_cols),
        compiler_params=pltpu.CompilerParams(
            dimension_semantics=("parallel",), vmem_limit_bytes=_VMEM_LIMIT),
    )(*data, proto_t, *weights)      # returns padded rows (sliced at the end)


# ------------------------- op tables (pallas / reference) -------------------
class PallasOps:
    entity = staticmethod(pallas_entity)
    proto_branch = staticmethod(pallas_proto_branch)
    relation = staticmethod(pallas_relation)


class RefOps:  # pure-JAX reference (same bf16 quantization points), no padding
    @staticmethod
    def entity(roi, post_emb):
        w, b = post_emb
        obj, sub = _entity_math(roi, w, b)
        return obj.astype(CDT), sub.astype(CDT)

    @staticmethod
    def proto_branch(rel_emb, scale, weights):
        return _proto_math(rel_emb, scale, weights).T.astype(CDT)

    @staticmethod
    def relation(s_emb, o_emb, s_vis, o_vis, union, proto_t, weights):
        return _relation_math(s_emb, o_emb, s_vis, o_vis, union, proto_t, weights)


# ----------------------------- parameters -----------------------------------
def _init_linear(key, fan_in, fan_out):
    kw, kb = jax.random.split(key)
    bound = 1.0 / np.sqrt(fan_in)
    w = jax.random.uniform(kw, (fan_in, fan_out), jnp.float32, -bound, bound).astype(CDT)
    b = jax.random.uniform(kb, (1, fan_out), jnp.float32, -bound, bound)
    return w, b


def _init_mlp2(key, d_in, d_hid, d_out):
    k1, k2 = jax.random.split(key)
    return _init_linear(k1, d_in, d_hid) + _init_linear(k2, d_hid, d_out)


def _init_gate(key):
    w, b = _init_linear(key, MLP_DIM * 2, MLP_DIM)
    return (w[:MLP_DIM], w[MLP_DIM:], b)          # pre-split K-halves


def _init_norm():
    return (jnp.ones((1, MLP_DIM), jnp.float32),
            jnp.zeros((1, MLP_DIM), jnp.float32))


def init_params(key):
    ks = iter(jax.random.split(key, 24))
    p = {}
    p["post_emb"] = _init_linear(next(ks), IN_CHANNELS, MLP_DIM * 2)
    p["obj_embed"] = 0.1 * jax.random.normal(next(ks), (NUM_OBJ_CLS, EMBED_DIM), jnp.float32)
    p["rel_embed"] = 0.1 * jax.random.normal(next(ks), (NUM_REL_CLS, EMBED_DIM), jnp.float32)
    p["W_sub"]  = _init_mlp2(next(ks), EMBED_DIM, MLP_DIM // 2, MLP_DIM)
    p["W_obj"]  = _init_mlp2(next(ks), EMBED_DIM, MLP_DIM // 2, MLP_DIM)
    p["W_pred"] = _init_mlp2(next(ks), EMBED_DIM, MLP_DIM // 2, MLP_DIM)
    p["gate_sub"]  = _init_gate(next(ks))
    p["gate_obj"]  = _init_gate(next(ks))
    p["gate_pred"] = _init_gate(next(ks))
    p["vis2sem"]      = _init_mlp2(next(ks), MLP_DIM, MLP_DIM * 2, MLP_DIM)
    p["project_head"] = _init_mlp2(next(ks), MLP_DIM, MLP_DIM, MLP_DIM * 2)
    p["down_samp"]    = _init_mlp2(next(ks), POOLING_DIM, MLP_DIM, MLP_DIM)
    p["linear_sub"]     = _init_linear(next(ks), MLP_DIM, MLP_DIM)
    p["linear_obj"]     = _init_linear(next(ks), MLP_DIM, MLP_DIM)
    p["linear_rel_rep"] = _init_linear(next(ks), MLP_DIM, MLP_DIM)
    p["norm_sub"] = _init_norm()
    p["norm_obj"] = _init_norm()
    p["norm_rel_rep"] = _init_norm()
    p["logit_scale"] = jnp.asarray(np.log(1.0 / 0.07), jnp.float32)
    return p


def _relation_weights(p):
    return (p["W_sub"] + p["W_obj"] + p["vis2sem"]
            + p["gate_sub"] + p["gate_obj"]
            + p["linear_sub"] + p["linear_obj"]
            + p["norm_sub"] + p["norm_obj"]
            + p["down_samp"] + p["gate_pred"]
            + p["linear_rel_rep"] + p["norm_rel_rep"]
            + p["project_head"])


def _proto_weights(p):
    return p["W_pred"] + p["project_head"]


def precompute_prototypes(ops, params):
    """Predicate prototypes are input-independent in eval: compute once."""
    scale = jnp.exp(params["logit_scale"])
    return ops.proto_branch(params["rel_embed"], scale, _proto_weights(params))


# ----------------------------- forward pass ---------------------------------
def pe_net_forward(ops, params, proto_t, roi_features, union_features,
                   obj_labels, rel_pair_idxs, num_objs, num_rels):
    """Eval-mode forward of PrototypeEmbeddingNetwork ('predcls')."""
    N = roi_features.shape[0]
    R = int(sum(num_rels))

    # ---- refine_obj_labels (GT-label path): to_onehot(labels, C, fill=1000) ----
    entity_dists = jnp.full((N, NUM_OBJ_CLS), -1000.0, jnp.float32)
    entity_dists = entity_dists.at[jnp.arange(N), obj_labels].set(1000.0)
    entity_preds = obj_labels
    # TODO(synk): pos_embed / lin_obj_cyx / out_obj are computed-but-dead in
    # predcls eval mode (never reach a returned value), so they are omitted.

    # ---- entity representations: post_emb -> (obj_rep, sub_rep), bf16 ----
    obj_rep, sub_rep = ops.entity(roi_features.astype(CDT), params["post_emb"])
    entity_embeds = params["obj_embed"][entity_preds].astype(CDT)

    # ---- gather relation pairs with global indices (row-wise equivalent of
    #      the original per-image loop) ----
    offsets = np.concatenate([[0], np.cumsum(num_objs)[:-1]]).astype(np.int32)
    sub_idx = jnp.concatenate([p[:, 0] + int(o) for p, o in zip(rel_pair_idxs, offsets)])
    obj_idx = jnp.concatenate([p[:, 1] + int(o) for p, o in zip(rel_pair_idxs, offsets)])
    # TODO(synk): at production R these gathers (and the row padding) could be
    # folded into the relation kernel via PrefetchScalarGridSpec + pl.Element
    # row blocks indexed by the prefetched pair tables.
    s_emb = entity_embeds[sub_idx]
    o_emb = entity_embeds[obj_idx]
    s_vis = sub_rep[sub_idx]
    o_vis = obj_rep[obj_idx]

    # ---- fused subject/object + predicate branch -> cosine logits ----
    rel_dists = ops.relation(s_emb, o_emb, s_vis, o_vis,
                             union_features.astype(CDT), proto_t,
                             _relation_weights(params))[:R, :NUM_REL_CLS]

    # per-image splits (torch .split semantics)
    entity_dists_out, rel_dists_out = [], []
    o0 = 0
    for n in num_objs:
        entity_dists_out.append(entity_dists[o0:o0 + n]); o0 += n
    r0 = 0
    for r in num_rels:
        rel_dists_out.append(rel_dists[r0:r0 + r]); r0 += r

    add_losses = {}
    # TODO(synk): training-only prototype losses (l21_loss, dist_loss2, loss_dis)
    # are not implemented; this is the eval-mode forward (dropout = identity).
    return entity_dists_out, rel_dists_out, add_losses


# ----------------------------- main ------------------------------------------
if __name__ == "__main__":
    key = jax.random.PRNGKey(0)
    kp, k1, k2, k3, k4 = jax.random.split(key, 5)
    params = init_params(kp)

    num_objs = [5, 7]       # objects per image
    num_rels = [6, 10]      # relation pairs per image
    N, R = sum(num_objs), sum(num_rels)

    roi_features = jax.random.normal(k1, (N, IN_CHANNELS), jnp.float32)
    union_features = jax.random.normal(k2, (R, POOLING_DIM), jnp.float32)
    obj_labels = jax.random.randint(k3, (N,), 1, NUM_OBJ_CLS, jnp.int32)
    rel_pair_idxs = []
    kk = k4
    for n, r in zip(num_objs, num_rels):
        kk, ka = jax.random.split(kk)
        rel_pair_idxs.append(jax.random.randint(ka, (r, 2), 0, n, jnp.int32))

    # prototypes computed once (hoisted out of the per-step path)
    proto_t_pallas = precompute_prototypes(PallasOps, params)
    ent_p, rel_p, _ = pe_net_forward(PallasOps, params, proto_t_pallas,
                                     roi_features, union_features,
                                     obj_labels, rel_pair_idxs, num_objs, num_rels)
    jax.block_until_ready(rel_p)
    jax.block_until_ready(ent_p)

    # verify against a pure-JAX reference using the same bf16 quantization
    proto_t_ref = precompute_prototypes(RefOps, params)
    ent_r, rel_r, _ = pe_net_forward(RefOps, params, proto_t_ref,
                                     roi_features, union_features,
                                     obj_labels, rel_pair_idxs, num_objs, num_rels)
    for a, b in zip(ent_p, ent_r):
        np.testing.assert_allclose(np.asarray(a), np.asarray(b), rtol=2e-2, atol=2e-2)
    for a, b in zip(rel_p, rel_r):
        np.testing.assert_allclose(np.asarray(a), np.asarray(b), rtol=2e-2, atol=2e-2)

    print("KERNEL_OK")
</pallas_src>

<mosaic_0001>
module attributes {stable_mosaic.version = 11 : i64} {
  func.func @_proto_kernel(%arg0: memref<128x128xf32, #tpu.memory_space<vmem>>, %arg1: memref<1xf32, #tpu.memory_space<smem>>, %arg2: memref<128x128xbf16, #tpu.memory_space<vmem>>, %arg3: memref<1x128xf32, #tpu.memory_space<vmem>>, %arg4: memref<128x256xbf16, #tpu.memory_space<vmem>>, %arg5: memref<1x256xf32, #tpu.memory_space<vmem>>, %arg6: memref<256x256xbf16, #tpu.memory_space<vmem>>, %arg7: memref<1x256xf32, #tpu.memory_space<vmem>>, %arg8: memref<256x512xbf16, #tpu.memory_space<vmem>>, %arg9: memref<1x512xf32, #tpu.memory_space<vmem>>, %arg10: memref<128x512xf32, #tpu.memory_space<vmem>>) attributes {dimension_semantics = [], scalar_prefetch = 0 : i64, scratch_operands = 0 : i64, tpu.core_type = #tpu.core_type<tc>} {
    %c0 = arith.constant 0 : index
    %c0_0 = arith.constant 0 : index
    %0 = vector.load %arg2[%c0, %c0_0] : memref<128x128xbf16, #tpu.memory_space<vmem>>, vector<128x128xbf16>
    %c0_1 = arith.constant 0 : index
    %c0_2 = arith.constant 0 : index
    %1 = vector.load %arg3[%c0_1, %c0_2] : memref<1x128xf32, #tpu.memory_space<vmem>>, vector<1x128xf32>
    %c0_3 = arith.constant 0 : index
    %c0_4 = arith.constant 0 : index
    %2 = vector.load %arg4[%c0_3, %c0_4] : memref<128x256xbf16, #tpu.memory_space<vmem>>, vector<128x256xbf16>
    %c0_5 = arith.constant 0 : index
    %c0_6 = arith.constant 0 : index
    %3 = vector.load %arg5[%c0_5, %c0_6] : memref<1x256xf32, #tpu.memory_space<vmem>>, vector<1x256xf32>
    %c0_7 = arith.constant 0 : index
    %c0_8 = arith.constant 0 : index
    %4 = vector.load %arg6[%c0_7, %c0_8] : memref<256x256xbf16, #tpu.memory_space<vmem>>, vector<256x256xbf16>
    %c0_9 = arith.constant 0 : index
    %c0_10 = arith.constant 0 : index
    %5 = vector.load %arg7[%c0_9, %c0_10] : memref<1x256xf32, #tpu.memory_space<vmem>>, vector<1x256xf32>
    %c0_11 = arith.constant 0 : index
    %c0_12 = arith.constant 0 : index
    %6 = vector.load %arg8[%c0_11, %c0_12] : memref<256x512xbf16, #tpu.memory_space<vmem>>, vector<256x512xbf16>
    %c0_13 = arith.constant 0 : index
    %c0_14 = arith.constant 0 : index
    %7 = vector.load %arg9[%c0_13, %c0_14] : memref<1x512xf32, #tpu.memory_space<vmem>>, vector<1x512xf32>
    %c0_15 = arith.constant 0 : index
    %c0_16 = arith.constant 0 : index
    %8 = vector.load %arg0[%c0_15, %c0_16] : memref<128x128xf32, #tpu.memory_space<vmem>>, vector<128x128xf32>
    %c0_17 = arith.constant 0 : index
    %9 = memref.load %arg1[%c0_17] : memref<1xf32, #tpu.memory_space<smem>>
    %10 = arith.truncf %8 : vector<128x128xf32> to vector<128x128xbf16>
    %cst = arith.constant dense<0.000000e+00> : vector<128x128xf32>
    %11 = tpu.matmul %10, %0, %cst {dimension_numbers = #tpu.dot_dimension_numbers<[1], [0], [0], [1], [0, 0, 1, 1], [], []>} : vector<128x128xbf16>, vector<128x128xbf16>, vector<128x128xf32> -> vector<128x128xf32>
    %12 = vector.broadcast %1 : vector<1x128xf32> to vector<128x128xf32>
    %13 = arith.addf %11, %12 : vector<128x128xf32>
    %cst_18 = arith.constant 0.000000e+00 : f32
    %14 = vector.broadcast %cst_18 : f32 to vector<128x128xf32>
    %15 = arith.maximumf %13, %14 : vector<128x128xf32>
    %16 = arith.truncf %15 : vector<128x128xf32> to vector<128x128xbf16>
    %cst_19 = arith.constant dense<0.000000e+00> : vector<128x256xf32>
    %17 = tpu.matmul %16, %2, %cst_19 {dimension_numbers = #tpu.dot_dimension_numbers<[1], [0], [0], [1], [0, 0, 1, 1], [], []>} : vector<128x128xbf16>, vector<128x256xbf16>, vector<128x256xf32> -> vector<128x256xf32>
    %18 = vector.broadcast %3 : vector<1x256xf32> to vector<128x256xf32>
    %19 = arith.addf %17, %18 : vector<128x256xf32>
    %cst_20 = arith.constant 0.000000e+00 : f32
    %20 = vector.broadcast %cst_20 : f32 to vector<128x256xf32>
    %21 = arith.maximumf %19, %20 : vector<128x256xf32>
    %22 = arith.truncf %21 : vector<128x256xf32> to vector<128x256xbf16>
    %cst_21 = arith.constant dense<0.000000e+00> : vector<128x256xf32>
    %23 = tpu.matmul %22, %4, %cst_21 {dimension_numbers = #tpu.dot_dimension_numbers<[1], [0], [0], [1], [0, 0, 1, 1], [], []>} : vector<128x256xbf16>, vector<256x256xbf16>, vector<128x256xf32> -> vector<128x256xf32>
    %24 = vector.broadcast %5 : vector<1x256xf32> to vector<128x256xf32>
    %25 = arith.addf %23, %24 : vector<128x256xf32>
    %cst_22 = arith.constant 0.000000e+00 : f32
    %26 = vector.broadcast %cst_22 : f32 to vector<128x256xf32>
    %27 = arith.maximumf %25, %26 : vector<128x256xf32>
    %28 = arith.truncf %27 : vector<128x256xf32> to vector<128x256xbf16>
    %cst_23 = arith.constant dense<0.000000e+00> : vector<128x512xf32>
    %29 = tpu.matmul %28, %6, %cst_23 {dimension_numbers = #tpu.dot_dimension_numbers<[1], [0], [0], [1], [0, 0, 1, 1], [], []>} : vector<128x256xbf16>, vector<256x512xbf16>, vector<128x512xf32> -> vector<128x512xf32>
    %30 = vector.broadcast %7 : vector<1x512xf32> to vector<128x512xf32>
    %31 = arith.addf %29, %30 : vector<128x512xf32>
    %32 = arith.mulf %31, %31 : vector<128x512xf32>
    %cst_24 = arith.constant dense<0.000000e+00> : vector<128xf32>
    %33 = vector.multi_reduction <add>, %32, %cst_24 [1] : vector<128x512xf32> to vector<128xf32>
    %34 = vector.shape_cast %33 : vector<128xf32> to vector<128x1xf32>
    %cst_25 = arith.constant 9.99999996E-13 : f32
    %35 = vector.broadcast %cst_25 : f32 to vector<128x1xf32>
    %36 = arith.addf %34, %35 : vector<128x1xf32>
    %37 = math.rsqrt %36 : vector<128x1xf32>
    %38 = vector.broadcast %37 : vector<128x1xf32> to vector<128x512xf32>
    %39 = arith.mulf %31, %38 : vector<128x512xf32>
    %40 = vector.broadcast %9 : f32 to vector<128x512xf32>
    %41 = arith.mulf %39, %40 : vector<128x512xf32>
    %c0_26 = arith.constant 0 : index
    %c0_27 = arith.constant 0 : index
    %42 = vector.load %arg10[%c0_26, %c0_27] : memref<128x512xf32, #tpu.memory_space<vmem>>, vector<128x512xf32>
    tpu.vector_store %arg10[%c0_26, %c0_27], %41 {strides = array<i32>} : memref<128x512xf32, #tpu.memory_space<vmem>>, vector<128x512xf32>,
    return
  }
}

</mosaic_0001>

<llo_original>
// kernel: tpu_custom_call.1
$region0: #{tpu_custom_call.1}
  #allocation0 [shape = 'u32[]', space=smem, size = 0x4, offset = 0x4, fixed_abs, tag = 'smem constant byte address 0x4 - core index']
  #allocation1 [shape = 'u32[144,128]{1,0:T(1,128)}', space=vmem, size = 0x12000, scoped, tag = 'internal scratch']
  #allocation2 [shape = 'f32[1]{0:T(128)S(6)}', space=smem, size = 0x200, scoped, tag = 'scoped memory for tpu_custom_call.1']
  %s0 = inlined_call_operand.hbm [shape: f32[128,128], index: 0, kind: input, shape index: {}]
  %s1 = inlined_call_operand.<no memory space> [shape: f32[1], index: 1, kind: input, shape index: {}]
  %s2 = inlined_call_operand.hbm [shape: bf16[128,128], index: 2, kind: input, shape index: {}]
  %s3 = inlined_call_operand.vmem [shape: f32[1,128], index: 3, kind: input, shape index: {}]
  %s4 = inlined_call_operand.hbm [shape: bf16[128,256], index: 4, kind: input, shape index: {}]
  %s5 = inlined_call_operand.vmem [shape: f32[1,256], index: 5, kind: input, shape index: {}]
  %s6 = inlined_call_operand.hbm [shape: bf16[256,256], index: 6, kind: input, shape index: {}]
  %s7 = inlined_call_operand.vmem [shape: f32[1,256], index: 7, kind: input, shape index: {}]
  %s8 = inlined_call_operand.hbm [shape: bf16[256,512], index: 8, kind: input, shape index: {}]
  %s9 = inlined_call_operand.vmem [shape: f32[1,512], index: 9, kind: input, shape index: {}]
  %s10 = inlined_call_operand.hbm [shape: f32[128,512], index: 10, kind: output, shape index: {}]
  %s11 = sld [smem:[#allocation0]]
  $region70: #{tpu_custom_call.1} parent=0
    _
  %s13 = ssub.s32 1, %s11
  %s14 = scalar_select 0, %s13, %s11
  %15 = sst [smem:[#allocation2]] %s1
  $region1: #{tpu_custom_call.1} parent=0
    #allocation3 [shape = 'u8[65536]{0}', space=vmem, size = 0x10000, scoped, tag = 'input window, operand 0, single buffered']
    #allocation4 [shape = 's32[1]{0}', space=sflag, size = 0x4, scoped, tag = 'scoped memory for tpu_custom_call.1']
    #allocation5 [shape = 's32[1]{0}', space=sflag, size = 0x4, scoped, tag = 'scoped memory for tpu_custom_call.1']
    #allocation6 [shape = 'u8[32768]{0}', space=vmem, size = 0x8000, scoped, tag = 'input window, operand 2, single buffered']
    #allocation7 [shape = 's32[1]{0}', space=sflag, size = 0x4, scoped, tag = 'scoped memory for tpu_custom_call.1']
    #allocation8 [shape = 'u8[65536]{0}', space=vmem, size = 0x10000, scoped, tag = 'input window, operand 4, single buffered']
    #allocation9 [shape = 'u8[131072]{0}', space=vmem, size = 0x20000, scoped, tag = 'input window, operand 6, single buffered']
    #allocation10 [shape = 's32[1]{0}', space=sflag, size = 0x4, scoped, tag = 'scoped memory for tpu_custom_call.1']
    #allocation11 [shape = 'u8[262144]{0}', space=vmem, size = 0x40000, scoped, tag = 'input window, operand 8, single buffered']
    #allocation12 [shape = 'u8[262144]{0}', space=vmem, size = 0x40000, scoped, tag = 'output window, operand 0, single buffered']
    %16 = vsyncpa [#allocation4], 0
    %17 = vsyncpa [#allocation7], 0
    %18 = vsyncpa [#allocation10], 0
    %19 = vsyncpa [#allocation5], 0
    // Predicated region
    $region2: #{tpu_custom_call.1} parent=1 // pred_check
      _
    $region3: #{tpu_custom_call.1} parent=1 // pred_check_branch
      %21 = sbr.rel (0) target = $region5
    $region4: #{tpu_custom_call.1} parent=1 // pred_region
      %s23 = ssub.s32 2048, 2048
      %24 = vsyncadd [#allocation4], %s23
      %s25 = sshll.u32 [#allocation3], 4
      %s26 = int_to_ptr.vmem [resolvable:$true] %s25
      %31 = dma.hbm_to_vmem [thread:$0]  %s0, 2048, %s26, [#allocation4], 128, 128, 8
    $region5: #{tpu_custom_call.1} parent=1 // pred_fallthru
      _
    // Predicated region
    $region6: #{tpu_custom_call.1} parent=1 // pred_check
      _
    $region7: #{tpu_custom_call.1} parent=1 // pred_check_branch
      %33 = sbr.rel (0) target = $region9
    $region8: #{tpu_custom_call.1} parent=1 // pred_region
      _
    $region9: #{tpu_custom_call.1} parent=1 // pred_fallthru
      _
    // Predicated region
    $region10: #{tpu_custom_call.1} parent=1 // pred_check
      _
    $region11: #{tpu_custom_call.1} parent=1 // pred_check_branch
      %35 = sbr.rel (0) target = $region13
    $region12: #{tpu_custom_call.1} parent=1 // pred_region
      %s37 = ssub.s32 1024, 1024
      %38 = vsyncadd [#allocation7], %s37
      %s39 = sshll.u32 [#allocation6], 4
      %s40 = int_to_ptr.vmem [resolvable:$true] %s39
      %45 = dma.hbm_to_vmem [thread:$0]  %s2, 1024, %s40, [#allocation7], 64, 64, 4
    $region13: #{tpu_custom_call.1} parent=1 // pred_fallthru
      _
    // Predicated region
    $region14: #{tpu_custom_call.1} parent=1 // pred_check
      _
    $region15: #{tpu_custom_call.1} parent=1 // pred_check_branch
      %47 = sbr.rel (0) target = $region17
    $region16: #{tpu_custom_call.1} parent=1 // pred_region
      _
    $region17: #{tpu_custom_call.1} parent=1 // pred_fallthru
      _
    // Predicated region
    $region18: #{tpu_custom_call.1} parent=1 // pred_check
      _
    $region19: #{tpu_custom_call.1} parent=1 // pred_check_branch
      %49 = sbr.rel (0) target = $region21
    $region20: #{tpu_custom_call.1} parent=1 // pred_region
      %s51 = ssub.s32 2048, 2048
      %52 = vsyncadd [#allocation7], %s51
      %s53 = sshll.u32 [#allocation8], 4
      %s54 = int_to_ptr.vmem [resolvable:$true] %s53
      %59 = dma.hbm_to_vmem [thread:$0]  %s4, 2048, %s54, [#allocation7], 128, 128, 8
    $region21: #{tpu_custom_call.1} parent=1 // pred_fallthru
      _
    // Predicated region
    $region22: #{tpu_custom_call.1} parent=1 // pred_check
      _
    $region23: #{tpu_custom_call.1} parent=1 // pred_check_branch
      %61 = sbr.rel (0) target = $region25
    $region24: #{tpu_custom_call.1} parent=1 // pred_region
      _
    $region25: #{tpu_custom_call.1} parent=1 // pred_fallthru
      _
    // Predicated region
    $region26: #{tpu_custom_call.1} parent=1 // pred_check
      _
    $region27: #{tpu_custom_call.1} parent=1 // pred_check_branch
      %63 = sbr.rel (0) target = $region29
    $region28: #{tpu_custom_call.1} parent=1 // pred_region
      %s65 = ssub.s32 4096, 4096
      %66 = vsyncadd [#allocation10], %s65
      %s67 = sshll.u32 [#allocation9], 4
      %s68 = int_to_ptr.vmem [resolvable:$true] %s67
      %73 = dma.hbm_to_vmem [thread:$0]  %s6, 4096, %s68, [#allocation10], 128, 128, 8
    $region29: #{tpu_custom_call.1} parent=1 // pred_fallthru
      _
    // Predicated region
    $region30: #{tpu_custom_call.1} parent=1 // pred_check
      _
    $region31: #{tpu_custom_call.1} parent=1 // pred_check_branch
      %75 = sbr.rel (0) target = $region33
    $region32: #{tpu_custom_call.1} parent=1 // pred_region
      _
    $region33: #{tpu_custom_call.1} parent=1 // pred_fallthru
      _
    // Predicated region
    $region34: #{tpu_custom_call.1} parent=1 // pred_check
      _
    $region35: #{tpu_custom_call.1} parent=1 // pred_check_branch
      %77 = sbr.rel (0) target = $region37
    $region36: #{tpu_custom_call.1} parent=1 // pred_region
      %s79 = ssub.s32 8192, 8192
      %80 = vsyncadd [#allocation10], %s79
      %s81 = sshll.u32 [#allocation11], 4
      %s82 = int_to_ptr.vmem [resolvable:$true] %s81
      %87 = dma.hbm_to_vmem [thread:$0]  %s8, 8192, %s82, [#allocation10], 256, 256, 16
    $region37: #{tpu_custom_call.1} parent=1 // pred_fallthru
      _
    // Predicated region
    $region38: #{tpu_custom_call.1} parent=1 // pred_check
      _
    $region39: #{tpu_custom_call.1} parent=1 // pred_check_branch
      %89 = sbr.rel (0) target = $region41
    $region40: #{tpu_custom_call.1} parent=1 // pred_region
      _
    $region41: #{tpu_custom_call.1} parent=1 // pred_fallthru
      _
    // Predicated region
    $region42: #{tpu_custom_call.1} parent=1 // pred_check
      _
    $region43: #{tpu_custom_call.1} parent=1 // pred_check_branch
      %91 = sbr.rel (0) target = $region45
    $region44: #{tpu_custom_call.1} parent=1 // pred_region
      %92 = dma.done [#allocation4], 2048
    $region45: #{tpu_custom_call.1} parent=1 // pred_fallthru
      _
    // Predicated region
    $region46: #{tpu_custom_call.1} parent=1 // pred_check
      _
    $region47: #{tpu_custom_call.1} parent=1 // pred_check_branch
      %94 = sbr.rel (0) target = $region49
    $region48: #{tpu_custom_call.1} parent=1 // pred_region
      %95 = dma.done [#allocation7], 1024
    $region49: #{tpu_custom_call.1} parent=1 // pred_fallthru
      _
    // Predicated region
    $region50: #{tpu_custom_call.1} parent=1 // pred_check
      _
    $region51: #{tpu_custom_call.1} parent=1 // pred_check_branch
      %97 = sbr.rel (0) target = $region53
    $region52: #{tpu_custom_call.1} parent=1 // pred_region
      %98 = dma.done [#allocation7], 2048
    $region53: #{tpu_custom_call.1} parent=1 // pred_fallthru
      _
    // Predicated region
    $region54: #{tpu_custom_call.1} parent=1 // pred_check
      _
    $region55: #{tpu_custom_call.1} parent=1 // pred_check_branch
      %100 = sbr.rel (0) target = $region57
    $region56: #{tpu_custom_call.1} parent=1 // pred_region
      %101 = dma.done [#allocation10], 4096
    $region57: #{tpu_custom_call.1} parent=1 // pred_fallthru
      _
    // Predicated region
    $region58: #{tpu_custom_call.1} parent=1 // pred_check
      _
    $region59: #{tpu_custom_call.1} parent=1 // pred_check_branch
      %103 = sbr.rel (0) target = $region61
    $region60: #{tpu_custom_call.1} parent=1 // pred_region
      %104 = dma.done [#allocation10], 8192
    $region61: #{tpu_custom_call.1} parent=1 // pred_fallthru
      _
    %v106 = vld [vmem:[#allocation6] sm:$0xf]
    %v107 = vld [vmem:[#allocation6 + $0x4] sm:$0xf]
    %v108 = vld [vmem:[#allocation6 + $0x8] sm:$0xf]
    %v109 = vld [vmem:[#allocation6 + $0xc] sm:$0xf]
    %v110 = vld [vmem:[#allocation6 + $0x10] sm:$0xf]
    %v111 = vld [vmem:[#allocation6 + $0x14] sm:$0xf]
    %v112 = vld [vmem:[#allocation6 + $0x18] sm:$0xf]
    %v113 = vld [vmem:[#allocation6 + $0x1c] sm:$0xf]
    %v114 = vld [vmem:[#allocation6 + $0x20] sm:$0xf]
    %v115 = vld [vmem:[#allocation6 + $0x24] sm:$0xf]
    %v116 = vld [vmem:[#allocation6 + $0x28] sm:$0xf]
    %v117 = vld [vmem:[#allocation6 + $0x2c] sm:$0xf]
    %v118 = vld [vmem:[#allocation6 + $0x30] sm:$0xf]
    %v119 = vld [vmem:[#allocation6 + $0x34] sm:$0xf]
    %v120 = vld [vmem:[#allocation6 + $0x38] sm:$0xf]
    %v121 = vld [vmem:[#allocation6 + $0x3c] sm:$0xf]
    %v122 = vld [vmem:[%s3] sm:$0x1]
    %v123 = vld [vmem:[#allocation8] sm:$0xff]
    %v124 = vld [vmem:[#allocation8 + $0x8] sm:$0xff]
    %v125 = vld [vmem:[#allocation8 + $0x10] sm:$0xff]
    %v126 = vld [vmem:[#allocation8 + $0x18] sm:$0xff]
    %v127 = vld [vmem:[#allocation8 + $0x20] sm:$0xff]
    %v128 = vld [vmem:[#allocation8 + $0x28] sm:$0xff]
    %v129 = vld [vmem:[#allocation8 + $0x30] sm:$0xff]
    %v130 = vld [vmem:[#allocation8 + $0x38] sm:$0xff]
    %v131 = vld [vmem:[#allocation8 + $0x40] sm:$0xff]
    %v132 = vld [vmem:[#allocation8 + $0x48] sm:$0xff]
    %v133 = vld [vmem:[#allocation8 + $0x50] sm:$0xff]
    %v134 = vld [vmem:[#allocation8 + $0x58] sm:$0xff]
    %v135 = vld [vmem:[#allocation8 + $0x60] sm:$0xff]
    %v136 = vld [vmem:[#allocation8 + $0x68] sm:$0xff]
    %v137 = vld [vmem:[#allocation8 + $0x70] sm:$0xff]
    %v138 = vld [vmem:[#allocation8 + $0x78] sm:$0xff]
    %v139 = vld [vmem:[%s5] sm:$0x3]
    %v140 = vld [vmem:[#allocation9] sm:$0xff]
    %v141 = vld [vmem:[#allocation9 + $0x8] sm:$0xff]
    %v142 = vld [vmem:[#allocation9 + $0x10] sm:$0xff]
    %v143 = vld [vmem:[#allocation9 + $0x18] sm:$0xff]
    %v144 = vld [vmem:[#allocation9 + $0x20] sm:$0xff]
    %v145 = vld [vmem:[#allocation9 + $0x28] sm:$0xff]
    %v146 = vld [vmem:[#allocation9 + $0x30] sm:$0xff]
    %v147 = vld [vmem:[#allocation9 + $0x38] sm:$0xff]
    %v148 = vld [vmem:[#allocation9 + $0x40] sm:$0xff]
    %v149 = vld [vmem:[#allocation9 + $0x48] sm:$0xff]
    %v150 = vld [vmem:[#allocation9 + $0x50] sm:$0xff]
    %v151 = vld [vmem:[#allocation9 + $0x58] sm:$0xff]
    %v152 = vld [vmem:[#allocation9 + $0x60] sm:$0xff]
    %v153 = vld [vmem:[#allocation9 + $0x68] sm:$0xff]
    %v154 = vld [vmem:[#allocation9 + $0x70] sm:$0xff]
    %v155 = vld [vmem:[#allocation9 + $0x78] sm:$0xff]
    %v156 = vld [vmem:[#allocation9 + $0x80] sm:$0xff]
    %v157 = vld [vmem:[#allocation9 + $0x88] sm:$0xff]
    %v158 = vld [vmem:[#allocation9 + $0x90] sm:$0xff]
    %v159 = vld [vmem:[#allocation9 + $0x98] sm:$0xff]
    %v160 = vld [vmem:[#allocation9 + $0xa0] sm:$0xff]
    %v161 = vld [vmem:[#allocation9 + $0xa8] sm:$0xff]
    %v162 = vld [vmem:[#allocation9 + $0xb0] sm:$0xff]
    %v163 = vld [vmem:[#allocation9 + $0xb8] sm:$0xff]
    %v164 = vld [vmem:[#allocation9 + $0xc0] sm:$0xff]
    %v165 = vld [vmem:[#allocation9 + $0xc8] sm:$0xff]
    %v166 = vld [vmem:[#allocation9 + $0xd0] sm:$0xff]
    %v167 = vld [vmem:[#allocation9 + $0xd8] sm:$0xff]
    %v168 = vld [vmem:[#allocation9 + $0xe0] sm:$0xff]
    %v169 = vld [vmem:[#allocation9 + $0xe8] sm:$0xff]
    %v170 = vld [vmem:[#allocation9 + $0xf0] sm:$0xff]
    %v171 = vld [vmem:[#allocation9 + $0xf8] sm:$0xff]
    %v172 = vld [vmem:[%s7] sm:$0x3]
    %v173 = vld [vmem:[#allocation11] sm:$0xff]
    %v174 = vld [vmem:[#allocation11 + $0x8] sm:$0xff]
    %v175 = vld [vmem:[#allocation11 + $0x10] sm:$0xff]
    %v176 = vld [vmem:[#allocation11 + $0x18] sm:$0xff]
    %v177 = vld [vmem:[#allocation11 + $0x20] sm:$0xff]
    %v178 = vld [vmem:[#allocation11 + $0x28] sm:$0xff]
    %v179 = vld [vmem:[#allocation11 + $0x30] sm:$0xff]
    %v180 = vld [vmem:[#allocation11 + $0x38] sm:$0xff]
    %v181 = vld [vmem:[#allocation11 + $0x40] sm:$0xff]
    %v182 = vld [vmem:[#allocation11 + $0x48] sm:$0xff]
    %v183 = vld [vmem:[#allocation11 + $0x50] sm:$0xff]
    %v184 = vld [vmem:[#allocation11 + $0x58] sm:$0xff]
    %v185 = vld [vmem:[#allocation11 + $0x60] sm:$0xff]
    %v186 = vld [vmem:[#allocation11 + $0x68] sm:$0xff]
    %v187 = vld [vmem:[#allocation11 + $0x70] sm:$0xff]
    %v188 = vld [vmem:[#allocation11 + $0x78] sm:$0xff]
    %v189 = vld [vmem:[#allocation11 + $0x80] sm:$0xff]
    %v190 = vld [vmem:[#allocation11 + $0x88] sm:$0xff]
    %v191 = vld [vmem:[#allocation11 + $0x90] sm:$0xff]
    %v192 = vld [vmem:[#allocation11 + $0x98] sm:$0xff]
    %v193 = vld [vmem:[#allocation11 + $0xa0] sm:$0xff]
    %v194 = vld [vmem:[#allocation11 + $0xa8] sm:$0xff]
    %v195 = vld [vmem:[#allocation11 + $0xb0] sm:$0xff]
    %v196 = vld [vmem:[#allocation11 + $0xb8] sm:$0xff]
    %v197 = vld [vmem:[#allocation11 + $0xc0] sm:$0xff]
    %v198 = vld [vmem:[#allocation11 + $0xc8] sm:$0xff]
    %v199 = vld [vmem:[#allocation11 + $0xd0] sm:$0xff]
    %v200 = vld [vmem:[#allocation11 + $0xd8] sm:$0xff]
    %v201 = vld [vmem:[#allocation11 + $0xe0] sm:$0xff]
    %v202 = vld [vmem:[#allocation11 + $0xe8] sm:$0xff]
    %v203 = vld [vmem:[#allocation11 + $0xf0] sm:$0xff]
    %v204 = vld [vmem:[#allocation11 + $0xf8] sm:$0xff]
    %v205 = vld [vmem:[#allocation11 + $0x100] sm:$0xff]
    %v206 = vld [vmem:[#allocation11 + $0x108] sm:$0xff]
    %v207 = vld [vmem:[#allocation11 + $0x110] sm:$0xff]
    %v208 = vld [vmem:[#allocation11 + $0x118] sm:$0xff]
    %v209 = vld [vmem:[#allocation11 + $0x120] sm:$0xff]
    %v210 = vld [vmem:[#allocation11 + $0x128] sm:$0xff]
    %v211 = vld [vmem:[#allocation11 + $0x130] sm:$0xff]
    %v212 = vld [vmem:[#allocation11 + $0x138] sm:$0xff]
    %v213 = vld [vmem:[#allocation11 + $0x140] sm:$0xff]
    %v214 = vld [vmem:[#allocation11 + $0x148] sm:$0xff]
    %v215 = vld [vmem:[#allocation11 + $0x150] sm:$0xff]
    %v216 = vld [vmem:[#allocation11 + $0x158] sm:$0xff]
    %v217 = vld [vmem:[#allocation11 + $0x160] sm:$0xff]
    %v218 = vld [vmem:[#allocation11 + $0x168] sm:$0xff]
    %v219 = vld [vmem:[#allocation11 + $0x170] sm:$0xff]
    %v220 = vld [vmem:[#allocation11 + $0x178] sm:$0xff]
    %v221 = vld [vmem:[#allocation11 + $0x180] sm:$0xff]
    %v222 = vld [vmem:[#allocation11 + $0x188] sm:$0xff]
    %v223 = vld [vmem:[#allocation11 + $0x190] sm:$0xff]
    %v224 = vld [vmem:[#allocation11 + $0x198] sm:$0xff]
    %v225 = vld [vmem:[#allocation11 + $0x1a0] sm:$0xff]
    %v226 = vld [vmem:[#allocation11 + $0x1a8] sm:$0xff]
    %v227 = vld [vmem:[#allocation11 + $0x1b0] sm:$0xff]
    %v228 = vld [vmem:[#allocation11 + $0x1b8] sm:$0xff]
    %v229 = vld [vmem:[#allocation11 + $0x1c0] sm:$0xff]
    %v230 = vld [vmem:[#allocation11 + $0x1c8] sm:$0xff]
    %v231 = vld [vmem:[#allocation11 + $0x1d0] sm:$0xff]
    %v232 = vld [vmem:[#allocation11 + $0x1d8] sm:$0xff]
    %v233 = vld [vmem:[#allocation11 + $0x1e0] sm:$0xff]
    %v234 = vld [vmem:[#allocation11 + $0x1e8] sm:$0xff]
    %v235 = vld [vmem:[#allocation11 + $0x1f0] sm:$0xff]
    %v236 = vld [vmem:[#allocation11 + $0x1f8] sm:$0xff]
    %v237 = vld [vmem:[%s9] sm:$0xf]
    %v238 = vld [vmem:[#allocation3] sm:$0xff]
    %v239 = vld [vmem:[#allocation3 + $0x8] sm:$0xff]
    %v240 = vld [vmem:[#allocation3 + $0x10] sm:$0xff]
    %v241 = vld [vmem:[#allocation3 + $0x18] sm:$0xff]
    %v242 = vld [vmem:[#allocation3 + $0x20] sm:$0xff]
    %v243 = vld [vmem:[#allocation3 + $0x28] sm:$0xff]
    %v244 = vld [vmem:[#allocation3 + $0x30] sm:$0xff]
    %v245 = vld [vmem:[#allocation3 + $0x38] sm:$0xff]
    %v246 = vld [vmem:[#allocation3 + $0x40] sm:$0xff]
    %v247 = vld [vmem:[#allocation3 + $0x48] sm:$0xff]
    %v248 = vld [vmem:[#allocation3 + $0x50] sm:$0xff]
    %v249 = vld [vmem:[#allocation3 + $0x58] sm:$0xff]
    %v250 = vld [vmem:[#allocation3 + $0x60] sm:$0xff]
    %v251 = vld [vmem:[#allocation3 + $0x68] sm:$0xff]
    %v252 = vld [vmem:[#allocation3 + $0x70] sm:$0xff]
    %v253 = vld [vmem:[#allocation3 + $0x78] sm:$0xff]
    %s254 = sld [smem:[#allocation2]]
    %v255 = vpack.c.bf16 %v239, %v238
    %v256 = vpack.c.bf16 %v241, %v240
    %v257 = vpack.c.bf16 %v243, %v242
    %v258 = vpack.c.bf16 %v245, %v244
    %v259 = vpack.c.bf16 %v247, %v246
    %v260 = vpack.c.bf16 %v249, %v248
    %v261 = vpack.c.bf16 %v251, %v250
    %v262 = vpack.c.bf16 %v253, %v252
    %v264 = vlaneseq
    %v265 = vshrl.u32 %v264, 7
    %v266 = vsub.s32 0, %v265
    %v267 = vrot.slane %v122, %v266
    %v285 = vunpack.c.l.b16 %v106
    %v286 = vunpack.c.l.b16 %v107
    %v287 = vunpack.c.l.b16 %v108
    %v288 = vunpack.c.l.b16 %v109
    %v289 = vunpack.c.l.b16 %v110
    %v290 = vunpack.c.l.b16 %v111
    %v291 = vunpack.c.l.b16 %v112
    %v292 = vunpack.c.l.b16 %v113
    %v293 = vunpack.c.l.b16 %v114
    %v294 = vunpack.c.l.b16 %v115
    %v295 = vunpack.c.l.b16 %v116
    %v296 = vunpack.c.l.b16 %v117
    %v297 = vunpack.c.l.b16 %v118
    %v298 = vunpack.c.l.b16 %v119
    %v299 = vunpack.c.l.b16 %v120
    %v300 = vunpack.c.l.b16 %v121
    %v301 = vpack.c.b16 %v286, %v285
    %v302 = vpack.c.b16 %v288, %v287
    %v303 = vpack.c.b16 %v290, %v289
    %v304 = vpack.c.b16 %v292, %v291
    %v305 = vpack.c.b16 %v294, %v293
    %v306 = vpack.c.b16 %v296, %v295
    %v307 = vpack.c.b16 %v298, %v297
    %v308 = vpack.c.b16 %v300, %v299
    %317 = vmatprep.subr.bf16.mxu0 0
    %318 = vmatpush1.bf16.msra.mxu0 %v308
    %319 = vmatprep.subr.bf16.mxu0 0
    %320 = vmatpush1.bf16.msra.mxu0 %v307
    %321 = vmatprep.subr.bf16.mxu0 0
    %322 = vmatpush1.bf16.msra.mxu0 %v306
    %323 = vmatprep.subr.bf16.mxu0 0
    %324 = vmatpush1.bf16.msra.mxu0 %v305
    %325 = vmatprep.subr.bf16.mxu0 0
    %326 = vmatpush1.bf16.msra.mxu0 %v304
    %327 = vmatprep.subr.bf16.mxu0 0
    %328 = vmatpush1.bf16.msra.mxu0 %v303
    %329 = vmatprep.subr.bf16.mxu0 0
    %330 = vmatpush1.bf16.msra.mxu0 %v302
    %331 = vmatprep.subr.bf16.mxu0 0
    %332 = vmatpush1.bf16.msra.mxu0 %v301
    %333 = vmatprep.subr.bf16.mxu0 0
    %334 = vmatpush2.bf16.msra.mxu0 0
    %335 = vmatprep.subr.bf16.mxu0 0
    %336 = vmatpush2.bf16.msra.mxu0 0
    %337 = vmatprep.subr.bf16.mxu0 0
    %338 = vmatpush2.bf16.msra.mxu0 0
    %339 = vmatprep.subr.bf16.mxu0 0
    %340 = vmatpush2.bf16.msra.mxu0 0
    %341 = vmatprep.subr.bf16.mxu0 0
    %342 = vmatpush2.bf16.msra.mxu0 0
    %343 = vmatprep.subr.bf16.mxu0 0
    %344 = vmatpush2.bf16.msra.mxu0 0
    %345 = vmatprep.subr.bf16.mxu0 0
    %346 = vmatpush2.bf16.msra.mxu0 0
    %347 = vmatprep.subr.bf16.mxu0 0
    %348 = vmatpush2.bf16.msra.mxu0 0
    %349 = vmatprep.mubr.bf16.mxu0 0
    %350 = vmatmul.mubr.bf16.gmra.mxu0 %v255
    %v351 = vpop.f32.mrf.mxu0
    %v352 = vadd.f32 %v267, %v351
    %v353 = vpop.f32.mrf.mxu0
    %v354 = vpop.f32.mrf.mxu0
    %v355 = vadd.f32 %v267, %v354
    %v356 = vpop.f32.mrf.mxu0
    %357 = vmatprep.mubr.bf16.mxu0 0
    %358 = vmatmul.mubr.bf16.gmra.mxu0 %v256
    %v359 = vpop.f32.mrf.mxu0
    %v360 = vadd.f32 %v267, %v359
    %v361 = vpop.f32.mrf.mxu0
    %v362 = vpop.f32.mrf.mxu0
    %v363 = vadd.f32 %v267, %v362
    %v364 = vpop.f32.mrf.mxu0
    %365 = vmatprep.mubr.bf16.mxu0 0
    %366 = vmatmul.mubr.bf16.gmra.mxu0 %v257
    %v367 = vpop.f32.mrf.mxu0
    %v368 = vadd.f32 %v267, %v367
    %v369 = vpop.f32.mrf.mxu0
    %v370 = vpop.f32.mrf.mxu0
    %v371 = vadd.f32 %v267, %v370
    %v372 = vpop.f32.mrf.mxu0
    %373 = vmatprep.mubr.bf16.mxu0 0
    %374 = vmatmul.mubr.bf16.gmra.mxu0 %v258
    %v375 = vpop.f32.mrf.mxu0
    %v376 = vadd.f32 %v267, %v375
    %v377 = vpop.f32.mrf.mxu0
    %v378 = vpop.f32.mrf.mxu0
    %v379 = vadd.f32 %v267, %v378
    %v380 = vpop.f32.mrf.mxu0
    %381 = vmatprep.mubr.bf16.mxu0 0
    %382 = vmatmul.mubr.bf16.gmra.mxu0 %v259
    %v383 = vpop.f32.mrf.mxu0
    %v384 = vadd.f32 %v267, %v383
    %v385 = vpop.f32.mrf.mxu0
    %v386 = vpop.f32.mrf.mxu0
    %v387 = vadd.f32 %v267, %v386
    %v388 = vpop.f32.mrf.mxu0
    %389 = vmatprep.mubr.bf16.mxu0 0
    %390 = vmatmul.mubr.bf16.gmra.mxu0 %v260
    %v391 = vpop.f32.mrf.mxu0
    %v392 = vadd.f32 %v267, %v391
    %v393 = vpop.f32.mrf.mxu0
    %v394 = vpop.f32.mrf.mxu0
    %v395 = vadd.f32 %v267, %v394
    %v396 = vpop.f32.mrf.mxu0
    %397 = vmatprep.mubr.bf16.mxu0 0
    %398 = vmatmul.mubr.bf16.gmra.mxu0 %v261
    %v399 = vpop.f32.mrf.mxu0
    %v400 = vadd.f32 %v267, %v399
    %v401 = vpop.f32.mrf.mxu0
    %v402 = vpop.f32.mrf.mxu0
    %v403 = vadd.f32 %v267, %v402
    %v404 = vpop.f32.mrf.mxu0
    %405 = vmatprep.mubr.bf16.mxu0 0
    %406 = vmatmul.mubr.bf16.gmra.mxu0 %v262
    %v407 = vpop.f32.mrf.mxu0
    %v408 = vadd.f32 %v267, %v407
    %v409 = vpop.f32.mrf.mxu0
    %v410 = vpop.f32.mrf.mxu0
    %v411 = vadd.f32 %v267, %v410
    %v412 = vpop.f32.mrf.mxu0
    %413 = vdwg.mxu0
    %v414 = vmax.f32 %v352, 0.0
    %v415 = vmax.f32 %v355, 0.0
    %v416 = vmax.f32 %v360, 0.0
    %v417 = vmax.f32 %v363, 0.0
    %v418 = vmax.f32 %v368, 0.0
    %v419 = vmax.f32 %v371, 0.0
    %v420 = vmax.f32 %v376, 0.0
    %v421 = vmax.f32 %v379, 0.0
    %v422 = vmax.f32 %v384, 0.0
    %v423 = vmax.f32 %v387, 0.0
    %v424 = vmax.f32 %v392, 0.0
    %v425 = vmax.f32 %v395, 0.0
    %v426 = vmax.f32 %v400, 0.0
    %v427 = vmax.f32 %v403, 0.0
    %v428 = vmax.f32 %v408, 0.0
    %v429 = vmax.f32 %v411, 0.0
    %v430 = vpack.c.bf16 %v415, %v414
    %v431 = vpack.c.bf16 %v417, %v416
    %v432 = vpack.c.bf16 %v419, %v418
    %v433 = vpack.c.bf16 %v421, %v420
    %v434 = vpack.c.bf16 %v423, %v422
    %v435 = vpack.c.bf16 %v425, %v424
    %v436 = vpack.c.bf16 %v427, %v426
    %v437 = vpack.c.bf16 %v429, %v428
    %v439 = vlaneseq
    %v440 = vshrl.u32 %v439, 7
    %v441 = vsub.s32 0, %v440
    %v442 = vrot.slane %v139, %v441
    %v443 = vlaneseq
    %v444 = vshrl.u32 %v443, 7
    %v445 = vsub.s32 1, %v444
    %v446 = vrot.slane %v139, %v445
    %v465 = vunpack.c.l.b16 %v123
    %v466 = vunpack.c.h.b16 %v123
    %v467 = vunpack.c.l.b16 %v124
    %v468 = vunpack.c.h.b16 %v124
    %v469 = vunpack.c.l.b16 %v125
    %v470 = vunpack.c.h.b16 %v125
    %v471 = vunpack.c.l.b16 %v126
    %v472 = vunpack.c.h.b16 %v126
    %v473 = vunpack.c.l.b16 %v127
    %v474 = vunpack.c.h.b16 %v127
    %v475 = vunpack.c.l.b16 %v128
    %v476 = vunpack.c.h.b16 %v128
    %v477 = vunpack.c.l.b16 %v129
    %v478 = vunpack.c.h.b16 %v129
    %v479 = vunpack.c.l.b16 %v130
    %v480 = vunpack.c.h.b16 %v130
    %v481 = vunpack.c.l.b16 %v131
    %v482 = vunpack.c.h.b16 %v131
    %v483 = vunpack.c.l.b16 %v132
    %v484 = vunpack.c.h.b16 %v132
    %v485 = vunpack.c.l.b16 %v133
    %v486 = vunpack.c.h.b16 %v133
    %v487 = vunpack.c.l.b16 %v134
    %v488 = vunpack.c.h.b16 %v134
    %v489 = vunpack.c.l.b16 %v135
    %v490 = vunpack.c.h.b16 %v135
    %v491 = vunpack.c.l.b16 %v136
    %v492 = vunpack.c.h.b16 %v136
    %v493 = vunpack.c.l.b16 %v137
    %v494 = vunpack.c.h.b16 %v137
    %v495 = vunpack.c.l.b16 %v138
    %v496 = vunpack.c.h.b16 %v138
    %v497 = vpack.c.b16 %v467, %v465
    %v498 = vpack.c.b16 %v468, %v466
    %v499 = vpack.c.b16 %v471, %v469
    %v500 = vpack.c.b16 %v472, %v470
    %v501 = vpack.c.b16 %v475, %v473
    %v502 = vpack.c.b16 %v476, %v474
    %v503 = vpack.c.b16 %v479, %v477
    %v504 = vpack.c.b16 %v480, %v478
    %v505 = vpack.c.b16 %v483, %v481
    %v506 = vpack.c.b16 %v484, %v482
    %v507 = vpack.c.b16 %v487, %v485
    %v508 = vpack.c.b16 %v488, %v486
    %v509 = vpack.c.b16 %v491, %v489
    %v510 = vpack.c.b16 %v492, %v490
    %v511 = vpack.c.b16 %v495, %v493
    %v512 = vpack.c.b16 %v496, %v494
    %529 = vmatprep.subr.bf16.mxu0 %v512
    %530 = vmatpush1.bf16.msra.mxu0 %v511
    %531 = vmatprep.subr.bf16.mxu0 %v510
    %532 = vmatpush1.bf16.msra.mxu0 %v509
    %533 = vmatprep.subr.bf16.mxu0 %v508
    %534 = vmatpush1.bf16.msra.mxu0 %v507
    %535 = vmatprep.subr.bf16.mxu0 %v506
    %536 = vmatpush1.bf16.msra.mxu0 %v505
    %537 = vmatprep.subr.bf16.mxu0 %v504
    %538 = vmatpush1.bf16.msra.mxu0 %v503
    %539 = vmatprep.subr.bf16.mxu0 %v502
    %540 = vmatpush1.bf16.msra.mxu0 %v501
    %541 = vmatprep.subr.bf16.mxu0 %v500
    %542 = vmatpush1.bf16.msra.mxu0 %v499
    %543 = vmatprep.subr.bf16.mxu0 %v498
    %544 = vmatpush1.bf16.msra.mxu0 %v497
    %545 = vmatprep.subr.bf16.mxu0 0
    %546 = vmatpush2.bf16.msra.mxu0 0
    %547 = vmatprep.subr.bf16.mxu0 0
    %548 = vmatpush2.bf16.msra.mxu0 0
    %549 = vmatprep.subr.bf16.mxu0 0
    %550 = vmatpush2.bf16.msra.mxu0 0
    %551 = vmatprep.subr.bf16.mxu0 0
    %552 = vmatpush2.bf16.msra.mxu0 0
    %553 = vmatprep.subr.bf16.mxu0 0
    %554 = vmatpush2.bf16.msra.mxu0 0
    %555 = vmatprep.subr.bf16.mxu0 0
    %556 = vmatpush2.bf16.msra.mxu0 0
    %557 = vmatprep.subr.bf16.mxu0 0
    %558 = vmatpush2.bf16.msra.mxu0 0
    %559 = vmatprep.subr.bf16.mxu0 0
    %560 = vmatpush2.bf16.msra.mxu0 0
    %561 = vmatprep.mubr.bf16.mxu0 0
    %562 = vmatmul.mubr.bf16.gmra.mxu0 %v430
    %v563 = vpop.f32.mrf.mxu0
    %v564 = vadd.f32 %v442, %v563
    %v565 = vpop.f32.mrf.mxu0
    %v566 = vadd.f32 %v446, %v565
    %v567 = vpop.f32.mrf.mxu0
    %v568 = vadd.f32 %v442, %v567
    %v569 = vpop.f32.mrf.mxu0
    %v570 = vadd.f32 %v446, %v569
    %571 = vmatprep.mubr.bf16.mxu0 0
    %572 = vmatmul.mubr.bf16.gmra.mxu0 %v431
    %v573 = vpop.f32.mrf.mxu0
    %v574 = vadd.f32 %v442, %v573
    %v575 = vpop.f32.mrf.mxu0
    %v576 = vadd.f32 %v446, %v575
    %v577 = vpop.f32.mrf.mxu0
    %v578 = vadd.f32 %v442, %v577
    %v579 = vpop.f32.mrf.mxu0
    %v580 = vadd.f32 %v446, %v579
    %581 = vmatprep.mubr.bf16.mxu0 0
    %582 = vmatmul.mubr.bf16.gmra.mxu0 %v432
    %v583 = vpop.f32.mrf.mxu0
    %v584 = vadd.f32 %v442, %v583
    %v585 = vpop.f32.mrf.mxu0
    %v586 = vadd.f32 %v446, %v585
    %v587 = vpop.f32.mrf.mxu0
    %v588 = vadd.f32 %v442, %v587
    %v589 = vpop.f32.mrf.mxu0
    %v590 = vadd.f32 %v446, %v589
    %591 = vmatprep.mubr.bf16.mxu0 0
    %592 = vmatmul.mubr.bf16.gmra.mxu0 %v433
    %v593 = vpop.f32.mrf.mxu0
    %v594 = vadd.f32 %v442, %v593
    %v595 = vpop.f32.mrf.mxu0
    %v596 = vadd.f32 %v446, %v595
    %v597 = vpop.f32.mrf.mxu0
    %v598 = vadd.f32 %v442, %v597
    %v599 = vpop.f32.mrf.mxu0
    %v600 = vadd.f32 %v446, %v599
    %601 = vmatprep.mubr.bf16.mxu0 0
    %602 = vmatmul.mubr.bf16.gmra.mxu0 %v434
    %v603 = vpop.f32.mrf.mxu0
    %v604 = vadd.f32 %v442, %v603
    %v605 = vpop.f32.mrf.mxu0
    %v606 = vadd.f32 %v446, %v605
    %v607 = vpop.f32.mrf.mxu0
    %v608 = vadd.f32 %v442, %v607
    %v609 = vpop.f32.mrf.mxu0
    %v610 = vadd.f32 %v446, %v609
    %611 = vmatprep.mubr.bf16.mxu0 0
    %612 = vmatmul.mubr.bf16.gmra.mxu0 %v435
    %v613 = vpop.f32.mrf.mxu0
    %v614 = vadd.f32 %v442, %v613
    %v615 = vpop.f32.mrf.mxu0
    %v616 = vadd.f32 %v446, %v615
    %v617 = vpop.f32.mrf.mxu0
    %v618 = vadd.f32 %v442, %v617
    %v619 = vpop.f32.mrf.mxu0
    %v620 = vadd.f32 %v446, %v619
    %621 = vmatprep.mubr.bf16.mxu0 0
    %622 = vmatmul.mubr.bf16.gmra.mxu0 %v436
    %v623 = vpop.f32.mrf.mxu0
    %v624 = vadd.f32 %v442, %v623
    %v625 = vpop.f32.mrf.mxu0
    %v626 = vadd.f32 %v446, %v625
    %v627 = vpop.f32.mrf.mxu0
    %v628 = vadd.f32 %v442, %v627
    %v629 = vpop.f32.mrf.mxu0
    %v630 = vadd.f32 %v446, %v629
    %631 = vmatprep.mubr.bf16.mxu0 0
    %632 = vmatmul.mubr.bf16.gmra.mxu0 %v437
    %v633 = vpop.f32.mrf.mxu0
    %v634 = vadd.f32 %v442, %v633
    %v635 = vpop.f32.mrf.mxu0
    %v636 = vadd.f32 %v446, %v635
    %v637 = vpop.f32.mrf.mxu0
    %v638 = vadd.f32 %v442, %v637
    %v639 = vpop.f32.mrf.mxu0
    %v640 = vadd.f32 %v446, %v639
    %641 = vdwg.mxu0
    %v642 = vmax.f32 %v564, 0.0
    %v643 = vmax.f32 %v566, 0.0
    %v644 = vmax.f32 %v568, 0.0
    %v645 = vmax.f32 %v570, 0.0
    %v646 = vmax.f32 %v574, 0.0
    %v647 = vmax.f32 %v576, 0.0
    %v648 = vmax.f32 %v578, 0.0
    %v649 = vmax.f32 %v580, 0.0
    %v650 = vmax.f32 %v584, 0.0
    %v651 = vmax.f32 %v586, 0.0
    %v652 = vmax.f32 %v588, 0.0
    %v653 = vmax.f32 %v590, 0.0
    %v654 = vmax.f32 %v594, 0.0
    %v655 = vmax.f32 %v596, 0.0
    %v656 = vmax.f32 %v598, 0.0
    %v657 = vmax.f32 %v600, 0.0
    %v658 = vmax.f32 %v604, 0.0
    %v659 = vmax.f32 %v606, 0.0
    %v660 = vmax.f32 %v608, 0.0
    %v661 = vmax.f32 %v610, 0.0
    %v662 = vmax.f32 %v614, 0.0
    %v663 = vmax.f32 %v616, 0.0
    %v664 = vmax.f32 %v618, 0.0
    %v665 = vmax.f32 %v620, 0.0
    %v666 = vmax.f32 %v624, 0.0
    %v667 = vmax.f32 %v626, 0.0
    %v668 = vmax.f32 %v628, 0.0
    %v669 = vmax.f32 %v630, 0.0
    %v670 = vmax.f32 %v634, 0.0
    %v671 = vmax.f32 %v636, 0.0
    %v672 = vmax.f32 %v638, 0.0
    %v673 = vmax.f32 %v640, 0.0
    %v674 = vpack.c.bf16 %v644, %v642
    %v675 = vpack.c.bf16 %v645, %v643
    %v676 = vpack.c.bf16 %v648, %v646
    %v677 = vpack.c.bf16 %v649, %v647
    %v678 = vpack.c.bf16 %v652, %v650
    %v679 = vpack.c.bf16 %v653, %v651
    %v680 = vpack.c.bf16 %v656, %v654
    %v681 = vpack.c.bf16 %v657, %v655
    %v682 = vpack.c.bf16 %v660, %v658
    %v683 = vpack.c.bf16 %v661, %v659
    %v684 = vpack.c.bf16 %v664, %v662
    %v685 = vpack.c.bf16 %v665, %v663
    %v686 = vpack.c.bf16 %v668, %v666
    %v687 = vpack.c.bf16 %v669, %v667
    %v688 = vpack.c.bf16 %v672, %v670
    %v689 = vpack.c.bf16 %v673, %v671
    %v691 = vlaneseq
    %v692 = vshrl.u32 %v691, 7
    %v693 = vsub.s32 0, %v692
    %v694 = vrot.slane %v172, %v693
    %v695 = vlaneseq
    %v696 = vshrl.u32 %v695, 7
    %v697 = vsub.s32 1, %v696
    %v698 = vrot.slane %v172, %v697
    %v733 = vunpack.c.l.b16 %v140
    %v734 = vunpack.c.h.b16 %v140
    %v735 = vunpack.c.l.b16 %v141
    %v736 = vunpack.c.h.b16 %v141
    %v737 = vunpack.c.l.b16 %v142
    %v738 = vunpack.c.h.b16 %v142
    %v739 = vunpack.c.l.b16 %v143
    %v740 = vunpack.c.h.b16 %v143
    %v741 = vunpack.c.l.b16 %v144
    %v742 = vunpack.c.h.b16 %v144
    %v743 = vunpack.c.l.b16 %v145
    %v744 = vunpack.c.h.b16 %v145
    %v745 = vunpack.c.l.b16 %v146
    %v746 = vunpack.c.h.b16 %v146
    %v747 = vunpack.c.l.b16 %v147
    %v748 = vunpack.c.h.b16 %v147
    %v749 = vunpack.c.l.b16 %v148
    %v750 = vunpack.c.h.b16 %v148
    %v751 = vunpack.c.l.b16 %v149
    %v752 = vunpack.c.h.b16 %v149
    %v753 = vunpack.c.l.b16 %v150
    %v754 = vunpack.c.h.b16 %v150
    %v755 = vunpack.c.l.b16 %v151
    %v756 = vunpack.c.h.b16 %v151
    %v757 = vunpack.c.l.b16 %v152
    %v758 = vunpack.c.h.b16 %v152
    %v759 = vunpack.c.l.b16 %v153
    %v760 = vunpack.c.h.b16 %v153
    %v761 = vunpack.c.l.b16 %v154
    %v762 = vunpack.c.h.b16 %v154
    %v763 = vunpack.c.l.b16 %v155
    %v764 = vunpack.c.h.b16 %v155
    %v765 = vunpack.c.l.b16 %v156
    %v766 = vunpack.c.h.b16 %v156
    %v767 = vunpack.c.l.b16 %v157
    %v768 = vunpack.c.h.b16 %v157
    %v769 = vunpack.c.l.b16 %v158
    %v770 = vunpack.c.h.b16 %v158
    %v771 = vunpack.c.l.b16 %v159
    %v772 = vunpack.c.h.b16 %v159
    %v773 = vunpack.c.l.b16 %v160
    %v774 = vunpack.c.h.b16 %v160
    %v775 = vunpack.c.l.b16 %v161
    %v776 = vunpack.c.h.b16 %v161
    %v777 = vunpack.c.l.b16 %v162
    %v778 = vunpack.c.h.b16 %v162
    %v779 = vunpack.c.l.b16 %v163
    %v780 = vunpack.c.h.b16 %v163
    %v781 = vunpack.c.l.b16 %v164
    %v782 = vunpack.c.h.b16 %v164
    %v783 = vunpack.c.l.b16 %v165
    %v784 = vunpack.c.h.b16 %v165
    %v785 = vunpack.c.l.b16 %v166
    %v786 = vunpack.c.h.b16 %v166
    %v787 = vunpack.c.l.b16 %v167
    %v788 = vunpack.c.h.b16 %v167
    %v789 = vunpack.c.l.b16 %v168
    %v790 = vunpack.c.h.b16 %v168
    %v791 = vunpack.c.l.b16 %v169
    %v792 = vunpack.c.h.b16 %v169
    %v793 = vunpack.c.l.b16 %v170
    %v794 = vunpack.c.h.b16 %v170
    %v795 = vunpack.c.l.b16 %v171
    %v796 = vunpack.c.h.b16 %v171
    %v797 = vpack.c.b16 %v735, %v733
    %v798 = vpack.c.b16 %v736, %v734
    %v799 = vpack.c.b16 %v739, %v737
    %v800 = vpack.c.b16 %v740, %v738
    %v801 = vpack.c.b16 %v743, %v741
    %v802 = vpack.c.b16 %v744, %v742
    %v803 = vpack.c.b16 %v747, %v745
    %v804 = vpack.c.b16 %v748, %v746
    %v805 = vpack.c.b16 %v751, %v749
    %v806 = vpack.c.b16 %v752, %v750
    %v807 = vpack.c.b16 %v755, %v753
    %v808 = vpack.c.b16 %v756, %v754
    %v809 = vpack.c.b16 %v759, %v757
    %v810 = vpack.c.b16 %v760, %v758
    %v811 = vpack.c.b16 %v763, %v761
    %v812 = vpack.c.b16 %v764, %v762
    %v813 = vpack.c.b16 %v767, %v765
    %v814 = vpack.c.b16 %v768, %v766
    %v815 = vpack.c.b16 %v771, %v769
    %v816 = vpack.c.b16 %v772, %v770
    %v817 = vpack.c.b16 %v775, %v773
    %v818 = vpack.c.b16 %v776, %v774
    %v819 = vpack.c.b16 %v779, %v777
    %v820 = vpack.c.b16 %v780, %v778
    %v821 = vpack.c.b16 %v783, %v781
    %v822 = vpack.c.b16 %v784, %v782
    %v823 = vpack.c.b16 %v787, %v785
    %v824 = vpack.c.b16 %v788, %v786
    %v825 = vpack.c.b16 %v791, %v789
    %v826 = vpack.c.b16 %v792, %v790
    %v827 = vpack.c.b16 %v795, %v793
    %v828 = vpack.c.b16 %v796, %v794
    %861 = vmatprep.subr.bf16.mxu0 %v812
    %862 = vmatpush1.bf16.msra.mxu0 %v811
    %863 = vmatprep.subr.bf16.mxu0 %v810
    %864 = vmatpush1.bf16.msra.mxu0 %v809
    %865 = vmatprep.subr.bf16.mxu0 %v808
    %866 = vmatpush1.bf16.msra.mxu0 %v807
    %867 = vmatprep.subr.bf16.mxu0 %v806
    %868 = vmatpush1.bf16.msra.mxu0 %v805
    %869 = vmatprep.subr.bf16.mxu0 %v804
    %870 = vmatpush1.bf16.msra.mxu0 %v803
    %871 = vmatprep.subr.bf16.mxu0 %v802
    %872 = vmatpush1.bf16.msra.mxu0 %v801
    %873 = vmatprep.subr.bf16.mxu0 %v800
    %874 = vmatpush1.bf16.msra.mxu0 %v799
    %875 = vmatprep.subr.bf16.mxu0 %v798
    %876 = vmatpush1.bf16.msra.mxu0 %v797
    %877 = vmatprep.subr.bf16.mxu0 %v828
    %878 = vmatpush2.bf16.msra.mxu0 %v827
    %879 = vmatprep.subr.bf16.mxu0 %v826
    %880 = vmatpush2.bf16.msra.mxu0 %v825
    %881 = vmatprep.subr.bf16.mxu0 %v824
    %882 = vmatpush2.bf16.msra.mxu0 %v823
    %883 = vmatprep.subr.bf16.mxu0 %v822
    %884 = vmatpush2.bf16.msra.mxu0 %v821
    %885 = vmatprep.subr.bf16.mxu0 %v820
    %886 = vmatpush2.bf16.msra.mxu0 %v819
    %887 = vmatprep.subr.bf16.mxu0 %v818
    %888 = vmatpush2.bf16.msra.mxu0 %v817
    %889 = vmatprep.subr.bf16.mxu0 %v816
    %890 = vmatpush2.bf16.msra.mxu0 %v815
    %891 = vmatprep.subr.bf16.mxu0 %v814
    %892 = vmatpush2.bf16.msra.mxu0 %v813
    %893 = vmatprep.mubr.bf16.mxu0 %v675
    %894 = vmatmul.mubr.bf16.gmra.mxu0 %v674
    %v895 = vpop.f32.mrf.mxu0
    %v896 = vadd.f32 %v694, %v895
    %v897 = vpop.f32.mrf.mxu0
    %v898 = vadd.f32 %v698, %v897
    %v899 = vpop.f32.mrf.mxu0
    %v900 = vadd.f32 %v694, %v899
    %v901 = vpop.f32.mrf.mxu0
    %v902 = vadd.f32 %v698, %v901
    %903 = vmatprep.mubr.bf16.mxu0 %v677
    %904 = vmatmul.mubr.bf16.gmra.mxu0 %v676
    %v905 = vpop.f32.mrf.mxu0
    %v906 = vadd.f32 %v694, %v905
    %v907 = vpop.f32.mrf.mxu0
    %v908 = vadd.f32 %v698, %v907
    %v909 = vpop.f32.mrf.mxu0
    %v910 = vadd.f32 %v694, %v909
    %v911 = vpop.f32.mrf.mxu0
    %v912 = vadd.f32 %v698, %v911
    %913 = vmatprep.mubr.bf16.mxu0 %v679
    %914 = vmatmul.mubr.bf16.gmra.mxu0 %v678
    %v915 = vpop.f32.mrf.mxu0
    %v916 = vadd.f32 %v694, %v915
    %v917 = vpop.f32.mrf.mxu0
    %v918 = vadd.f32 %v698, %v917
    %v919 = vpop.f32.mrf.mxu0
    %v920 = vadd.f32 %v694, %v919
    %v921 = vpop.f32.mrf.mxu0
    %v922 = vadd.f32 %v698, %v921
    %923 = vmatprep.mubr.bf16.mxu0 %v681
    %924 = vmatmul.mubr.bf16.gmra.mxu0 %v680
    %v925 = vpop.f32.mrf.mxu0
    %v926 = vadd.f32 %v694, %v925
    %v927 = vpop.f32.mrf.mxu0
    %v928 = vadd.f32 %v698, %v927
    %v929 = vpop.f32.mrf.mxu0
    %v930 = vadd.f32 %v694, %v929
    %v931 = vpop.f32.mrf.mxu0
    %v932 = vadd.f32 %v698, %v931
    %933 = vmatprep.mubr.bf16.mxu0 %v683
    %934 = vmatmul.mubr.bf16.gmra.mxu0 %v682
    %v935 = vpop.f32.mrf.mxu0
    %v936 = vadd.f32 %v694, %v935
    %v937 = vpop.f32.mrf.mxu0
    %v938 = vadd.f32 %v698, %v937
    %v939 = vpop.f32.mrf.mxu0
    %v940 = vadd.f32 %v694, %v939
    %v941 = vpop.f32.mrf.mxu0
    %v942 = vadd.f32 %v698, %v941
    %943 = vmatprep.mubr.bf16.mxu0 %v685
    %944 = vmatmul.mubr.bf16.gmra.mxu0 %v684
    %v945 = vpop.f32.mrf.mxu0
    %v946 = vadd.f32 %v694, %v945
    %v947 = vpop.f32.mrf.mxu0
    %v948 = vadd.f32 %v698, %v947
    %v949 = vpop.f32.mrf.mxu0
    %v950 = vadd.f32 %v694, %v949
    %v951 = vpop.f32.mrf.mxu0
    %v952 = vadd.f32 %v698, %v951
    %953 = vmatprep.mubr.bf16.mxu0 %v687
    %954 = vmatmul.mubr.bf16.gmra.mxu0 %v686
    %v955 = vpop.f32.mrf.mxu0
    %v956 = vadd.f32 %v694, %v955
    %v957 = vpop.f32.mrf.mxu0
    %v958 = vadd.f32 %v698, %v957
    %v959 = vpop.f32.mrf.mxu0
    %v960 = vadd.f32 %v694, %v959
    %v961 = vpop.f32.mrf.mxu0
    %v962 = vadd.f32 %v698, %v961
    %963 = vmatprep.mubr.bf16.mxu0 %v689
    %964 = vmatmul.mubr.bf16.gmra.mxu0 %v688
    %v965 = vpop.f32.mrf.mxu0
    %v966 = vadd.f32 %v694, %v965
    %v967 = vpop.f32.mrf.mxu0
    %v968 = vadd.f32 %v698, %v967
    %v969 = vpop.f32.mrf.mxu0
    %v970 = vadd.f32 %v694, %v969
    %v971 = vpop.f32.mrf.mxu0
    %v972 = vadd.f32 %v698, %v971
    %973 = vdwg.mxu0
    %v974 = vmax.f32 %v896, 0.0
    %v975 = vmax.f32 %v898, 0.0
    %v976 = vmax.f32 %v900, 0.0
    %v977 = vmax.f32 %v902, 0.0
    %v978 = vmax.f32 %v906, 0.0
    %v979 = vmax.f32 %v908, 0.0
    %v980 = vmax.f32 %v910, 0.0
    %v981 = vmax.f32 %v912, 0.0
    %v982 = vmax.f32 %v916, 0.0
    %v983 = vmax.f32 %v918, 0.0
    %v984 = vmax.f32 %v920, 0.0
    %v985 = vmax.f32 %v922, 0.0
    %v986 = vmax.f32 %v926, 0.0
    %v987 = vmax.f32 %v928, 0.0
    %v988 = vmax.f32 %v930, 0.0
    %v989 = vmax.f32 %v932, 0.0
    %v990 = vmax.f32 %v936, 0.0
    %v991 = vmax.f32 %v938, 0.0
    %v992 = vmax.f32 %v940, 0.0
    %v993 = vmax.f32 %v942, 0.0
    %v994 = vmax.f32 %v946, 0.0
    %v995 = vmax.f32 %v948, 0.0
    %v996 = vmax.f32 %v950, 0.0
    %v997 = vmax.f32 %v952, 0.0
    %v998 = vmax.f32 %v956, 0.0
    %v999 = vmax.f32 %v958, 0.0
    %v1000 = vmax.f32 %v960, 0.0
    %v1001 = vmax.f32 %v962, 0.0
    %v1002 = vmax.f32 %v966, 0.0
    %v1003 = vmax.f32 %v968, 0.0
    %v1004 = vmax.f32 %v970, 0.0
    %v1005 = vmax.f32 %v972, 0.0
    %v1006 = vpack.c.bf16 %v976, %v974
    %v1007 = vpack.c.bf16 %v977, %v975
    %v1008 = vpack.c.bf16 %v980, %v978
    %v1009 = vpack.c.bf16 %v981, %v979
    %v1010 = vpack.c.bf16 %v984, %v982
    %v1011 = vpack.c.bf16 %v985, %v983
    %v1012 = vpack.c.bf16 %v988, %v986
    %v1013 = vpack.c.bf16 %v989, %v987
    %v1014 = vpack.c.bf16 %v992, %v990
    %v1015 = vpack.c.bf16 %v993, %v991
    %v1016 = vpack.c.bf16 %v996, %v994
    %v1017 = vpack.c.bf16 %v997, %v995
    %v1018 = vpack.c.bf16 %v1000, %v998
    %v1019 = vpack.c.bf16 %v1001, %v999
    %v1020 = vpack.c.bf16 %v1004, %v1002
    %v1021 = vpack.c.bf16 %v1005, %v1003
    %v1023 = vlaneseq
    %v1024 = vshrl.u32 %v1023, 7
    %v1025 = vsub.s32 0, %v1024
    %v1026 = vrot.slane %v237, %v1025
    %v1027 = vlaneseq
    %v1028 = vshrl.u32 %v1027, 7
    %v1029 = vsub.s32 1, %v1028
    %v1030 = vrot.slane %v237, %v1029
    %v1031 = vlaneseq
    %v1032 = vshrl.u32 %v1031, 7
    %v1033 = vsub.s32 2, %v1032
    %v1034 = vrot.slane %v237, %v1033
    %v1035 = vlaneseq
    %v1036 = vshrl.u32 %v1035, 7
    %v1037 = vsub.s32 3, %v1036
    %v1038 = vrot.slane %v237, %v1037
    %v1107 = vunpack.c.l.b16 %v173
    %v1108 = vunpack.c.h.b16 %v173
    %v1109 = vunpack.c.l.b16 %v174
    %v1110 = vunpack.c.h.b16 %v174
    %v1111 = vunpack.c.l.b16 %v175
    %v1112 = vunpack.c.h.b16 %v175
    %v1113 = vunpack.c.l.b16 %v176
    %v1114 = vunpack.c.h.b16 %v176
    %v1115 = vunpack.c.l.b16 %v177
    %v1116 = vunpack.c.h.b16 %v177
    %v1117 = vunpack.c.l.b16 %v178
    %v1118 = vunpack.c.h.b16 %v178
    %v1119 = vunpack.c.l.b16 %v179
    %v1120 = vunpack.c.h.b16 %v179
    %v1121 = vunpack.c.l.b16 %v180
    %v1122 = vunpack.c.h.b16 %v180
    %v1123 = vunpack.c.l.b16 %v181
    %v1124 = vunpack.c.h.b16 %v181
    %v1125 = vunpack.c.l.b16 %v182
    %v1126 = vunpack.c.h.b16 %v182
    %v1127 = vunpack.c.l.b16 %v183
    %v1128 = vunpack.c.h.b16 %v183
    %v1129 = vunpack.c.l.b16 %v184
    %v1130 = vunpack.c.h.b16 %v184
    %v1131 = vunpack.c.l.b16 %v185
    %v1132 = vunpack.c.h.b16 %v185
    %v1133 = vunpack.c.l.b16 %v186
    %v1134 = vunpack.c.h.b16 %v186
    %v1135 = vunpack.c.l.b16 %v187
    %v1136 = vunpack.c.h.b16 %v187
    %v1137 = vunpack.c.l.b16 %v188
    %v1138 = vunpack.c.h.b16 %v188
    %v1139 = vunpack.c.l.b16 %v189
    %v1140 = vunpack.c.h.b16 %v189
    %v1141 = vunpack.c.l.b16 %v190
    %v1142 = vunpack.c.h.b16 %v190
    %v1143 = vunpack.c.l.b16 %v191
    %v1144 = vunpack.c.h.b16 %v191
    %v1145 = vunpack.c.l.b16 %v192
    %v1146 = vunpack.c.h.b16 %v192
    %v1147 = vunpack.c.l.b16 %v193
    %v1148 = vunpack.c.h.b16 %v193
    %v1149 = vunpack.c.l.b16 %v194
    %v1150 = vunpack.c.h.b16 %v194
    %v1151 = vunpack.c.l.b16 %v195
    %v1152 = vunpack.c.h.b16 %v195
    %v1153 = vunpack.c.l.b16 %v196
    %v1154 = vunpack.c.h.b16 %v196
    %v1155 = vunpack.c.l.b16 %v197
    %v1156 = vunpack.c.h.b16 %v197
    %v1157 = vunpack.c.l.b16 %v198
    %v1158 = vunpack.c.h.b16 %v198
    %v1159 = vunpack.c.l.b16 %v199
    %v1160 = vunpack.c.h.b16 %v199
    %v1161 = vunpack.c.l.b16 %v200
    %v1162 = vunpack.c.h.b16 %v200
    %v1163 = vunpack.c.l.b16 %v201
    %v1164 = vunpack.c.h.b16 %v201
    %v1165 = vunpack.c.l.b16 %v202
    %v1166 = vunpack.c.h.b16 %v202
    %v1167 = vunpack.c.l.b16 %v203
    %v1168 = vunpack.c.h.b16 %v203
    %v1169 = vunpack.c.l.b16 %v204
    %v1170 = vunpack.c.h.b16 %v204
    %v1171 = vunpack.c.l.b16 %v205
    %v1172 = vunpack.c.h.b16 %v205
    %v1173 = vunpack.c.l.b16 %v206
    %v1174 = vunpack.c.h.b16 %v206
    %v1175 = vunpack.c.l.b16 %v207
    %v1176 = vunpack.c.h.b16 %v207
    %v1177 = vunpack.c.l.b16 %v208
    %v1178 = vunpack.c.h.b16 %v208
    %v1179 = vunpack.c.l.b16 %v209
    %v1180 = vunpack.c.h.b16 %v209
    %v1181 = vunpack.c.l.b16 %v210
    %v1182 = vunpack.c.h.b16 %v210
    %v1183 = vunpack.c.l.b16 %v211
    %v1184 = vunpack.c.h.b16 %v211
    %v1185 = vunpack.c.l.b16 %v212
    %v1186 = vunpack.c.h.b16 %v212
    %v1187 = vunpack.c.l.b16 %v213
    %v1188 = vunpack.c.h.b16 %v213
    %v1189 = vunpack.c.l.b16 %v214
    %v1190 = vunpack.c.h.b16 %v214
    %v1191 = vunpack.c.l.b16 %v215
    %v1192 = vunpack.c.h.b16 %v215
    %v1193 = vunpack.c.l.b16 %v216
    %v1194 = vunpack.c.h.b16 %v216
    %v1195 = vunpack.c.l.b16 %v217
    %v1196 = vunpack.c.h.b16 %v217
    %v1197 = vunpack.c.l.b16 %v218
    %v1198 = vunpack.c.h.b16 %v218
    %v1199 = vunpack.c.l.b16 %v219
    %v1200 = vunpack.c.h.b16 %v219
    %v1201 = vunpack.c.l.b16 %v220
    %v1202 = vunpack.c.h.b16 %v220
    %v1203 = vunpack.c.l.b16 %v221
    %v1204 = vunpack.c.h.b16 %v221
    %v1205 = vunpack.c.l.b16 %v222
    %v1206 = vunpack.c.h.b16 %v222
    %v1207 = vunpack.c.l.b16 %v223
    %v1208 = vunpack.c.h.b16 %v223
    %v1209 = vunpack.c.l.b16 %v224
    %v1210 = vunpack.c.h.b16 %v224
    %v1211 = vunpack.c.l.b16 %v225
    %v1212 = vunpack.c.h.b16 %v225
    %v1213 = vunpack.c.l.b16 %v226
    %v1214 = vunpack.c.h.b16 %v226
    %v1215 = vunpack.c.l.b16 %v227
    %v1216 = vunpack.c.h.b16 %v227
    %v1217 = vunpack.c.l.b16 %v228
    %v1218 = vunpack.c.h.b16 %v228
    %v1219 = vunpack.c.l.b16 %v229
    %v1220 = vunpack.c.h.b16 %v229
    %v1221 = vunpack.c.l.b16 %v230
    %v1222 = vunpack.c.h.b16 %v230
    %v1223 = vunpack.c.l.b16 %v231
    %v1224 = vunpack.c.h.b16 %v231
    %v1225 = vunpack.c.l.b16 %v232
    %v1226 = vunpack.c.h.b16 %v232
    %v1227 = vunpack.c.l.b16 %v233
    %v1228 = vunpack.c.h.b16 %v233
    %v1229 = vunpack.c.l.b16 %v234
    %v1230 = vunpack.c.h.b16 %v234
    %v1231 = vunpack.c.l.b16 %v235
    %v1232 = vunpack.c.h.b16 %v235
    %v1233 = vunpack.c.l.b16 %v236
    %v1234 = vunpack.c.h.b16 %v236
    %v1235 = vpack.c.b16 %v1111, %v1107
    %v1236 = vpack.c.b16 %v1112, %v1108
    %v1237 = vpack.c.b16 %v1113, %v1109
    %v1238 = vpack.c.b16 %v1114, %v1110
    %v1239 = vpack.c.b16 %v1119, %v1115
    %v1240 = vpack.c.b16 %v1120, %v1116
    %v1241 = vpack.c.b16 %v1121, %v1117
    %v1242 = vpack.c.b16 %v1122, %v1118
    %v1243 = vpack.c.b16 %v1127, %v1123
    %v1244 = vpack.c.b16 %v1128, %v1124
    %v1245 = vpack.c.b16 %v1129, %v1125
    %v1246 = vpack.c.b16 %v1130, %v1126
    %v1247 = vpack.c.b16 %v1135, %v1131
    %v1248 = vpack.c.b16 %v1136, %v1132
    %v1249 = vpack.c.b16 %v1137, %v1133
    %v1250 = vpack.c.b16 %v1138, %v1134
    %v1251 = vpack.c.b16 %v1143, %v1139
    %v1252 = vpack.c.b16 %v1144, %v1140
    %v1253 = vpack.c.b16 %v1145, %v1141
    %v1254 = vpack.c.b16 %v1146, %v1142
    %v1255 = vpack.c.b16 %v1151, %v1147
    %v1256 = vpack.c.b16 %v1152, %v1148
    %v1257 = vpack.c.b16 %v1153, %v1149
    %v1258 = vpack.c.b16 %v1154, %v1150
    %v1259 = vpack.c.b16 %v1159, %v1155
    %v1260 = vpack.c.b16 %v1160, %v1156
    %v1261 = vpack.c.b16 %v1161, %v1157
    %v1262 = vpack.c.b16 %v1162, %v1158
    %v1263 = vpack.c.b16 %v1167, %v1163
    %v1264 = vpack.c.b16 %v1168, %v1164
    %v1265 = vpack.c.b16 %v1169, %v1165
    %v1266 = vpack.c.b16 %v1170, %v1166
    %v1267 = vpack.c.b16 %v1175, %v1171
    %v1268 = vpack.c.b16 %v1176, %v1172
    %v1269 = vpack.c.b16 %v1177, %v1173
    %v1270 = vpack.c.b16 %v1178, %v1174
    %v1271 = vpack.c.b16 %v1183, %v1179
    %v1272 = vpack.c.b16 %v1184, %v1180
    %v1273 = vpack.c.b16 %v1185, %v1181
    %v1274 = vpack.c.b16 %v1186, %v1182
    %v1275 = vpack.c.b16 %v1191, %v1187
    %v1276 = vpack.c.b16 %v1192, %v1188
    %v1277 = vpack.c.b16 %v1193, %v1189
    %v1278 = vpack.c.b16 %v1194, %v1190
    %v1279 = vpack.c.b16 %v1199, %v1195
    %v1280 = vpack.c.b16 %v1200, %v1196
    %v1281 = vpack.c.b16 %v1201, %v1197
    %v1282 = vpack.c.b16 %v1202, %v1198
    %v1283 = vpack.c.b16 %v1207, %v1203
    %v1284 = vpack.c.b16 %v1208, %v1204
    %v1285 = vpack.c.b16 %v1209, %v1205
    %v1286 = vpack.c.b16 %v1210, %v1206
    %v1287 = vpack.c.b16 %v1215, %v1211
    %v1288 = vpack.c.b16 %v1216, %v1212
    %v1289 = vpack.c.b16 %v1217, %v1213
    %v1290 = vpack.c.b16 %v1218, %v1214
    %v1291 = vpack.c.b16 %v1223, %v1219
    %v1292 = vpack.c.b16 %v1224, %v1220
    %v1293 = vpack.c.b16 %v1225, %v1221
    %v1294 = vpack.c.b16 %v1226, %v1222
    %v1295 = vpack.c.b16 %v1231, %v1227
    %v1296 = vpack.c.b16 %v1232, %v1228
    %v1297 = vpack.c.b16 %v1233, %v1229
    %v1298 = vpack.c.b16 %v1234, %v1230
    %1363 = vmatprep.subr.bf16.mxu0 %v1264
    %1364 = vmatpush1.bf16.msra.mxu0 %v1263
    %1365 = vmatprep.subr.bf16.mxu0 %v1260
    %1366 = vmatpush1.bf16.msra.mxu0 %v1259
    %1367 = vmatprep.subr.bf16.mxu0 %v1256
    %1368 = vmatpush1.bf16.msra.mxu0 %v1255
    %1369 = vmatprep.subr.bf16.mxu0 %v1252
    %1370 = vmatpush1.bf16.msra.mxu0 %v1251
    %1371 = vmatprep.subr.bf16.mxu0 %v1248
    %1372 = vmatpush1.bf16.msra.mxu0 %v1247
    %1373 = vmatprep.subr.bf16.mxu0 %v1244
    %1374 = vmatpush1.bf16.msra.mxu0 %v1243
    %1375 = vmatprep.subr.bf16.mxu0 %v1240
    %1376 = vmatpush1.bf16.msra.mxu0 %v1239
    %1377 = vmatprep.subr.bf16.mxu0 %v1236
    %1378 = vmatpush1.bf16.msra.mxu0 %v1235
    %1379 = vmatprep.subr.bf16.mxu0 %v1296
    %1380 = vmatpush2.bf16.msra.mxu0 %v1295
    %1381 = vmatprep.subr.bf16.mxu0 %v1292
    %1382 = vmatpush2.bf16.msra.mxu0 %v1291
    %1383 = vmatprep.subr.bf16.mxu0 %v1288
    %1384 = vmatpush2.bf16.msra.mxu0 %v1287
    %1385 = vmatprep.subr.bf16.mxu0 %v1284
    %1386 = vmatpush2.bf16.msra.mxu0 %v1283
    %1387 = vmatprep.subr.bf16.mxu0 %v1280
    %1388 = vmatpush2.bf16.msra.mxu0 %v1279
    %1389 = vmatprep.subr.bf16.mxu0 %v1276
    %1390 = vmatpush2.bf16.msra.mxu0 %v1275
    %1391 = vmatprep.subr.bf16.mxu0 %v1272
    %1392 = vmatpush2.bf16.msra.mxu0 %v1271
    %1393 = vmatprep.subr.bf16.mxu0 %v1268
    %1394 = vmatpush2.bf16.msra.mxu0 %v1267
    %1395 = vmatprep.mubr.bf16.mxu0 %v1007
    %1396 = vmatmul.mubr.bf16.gmra.mxu0 %v1006
    %v1397 = vpop.f32.mrf.mxu0
    %v1398 = vadd.f32 %v1026, %v1397
    %v1399 = vpop.f32.mrf.mxu0
    %v1400 = vadd.f32 %v1030, %v1399
    %v1401 = vpop.f32.mrf.mxu0
    %v1402 = vadd.f32 %v1026, %v1401
    %v1403 = vpop.f32.mrf.mxu0
    %v1404 = vadd.f32 %v1030, %v1403
    %1405 = vmatprep.mubr.bf16.mxu0 %v1009
    %1406 = vmatmul.mubr.bf16.gmra.mxu0 %v1008
    %v1407 = vpop.f32.mrf.mxu0
    %v1408 = vadd.f32 %v1026, %v1407
    %v1409 = vpop.f32.mrf.mxu0
    %v1410 = vadd.f32 %v1030, %v1409
    %v1411 = vpop.f32.mrf.mxu0
    %v1412 = vadd.f32 %v1026, %v1411
    %v1413 = vpop.f32.mrf.mxu0
    %v1414 = vadd.f32 %v1030, %v1413
    %1415 = vmatprep.mubr.bf16.mxu0 %v1011
    %1416 = vmatmul.mubr.bf16.gmra.mxu0 %v1010
    %v1417 = vpop.f32.mrf.mxu0
    %v1418 = vadd.f32 %v1026, %v1417
    %v1419 = vpop.f32.mrf.mxu0
    %v1420 = vadd.f32 %v1030, %v1419
    %v1421 = vpop.f32.mrf.mxu0
    %v1422 = vadd.f32 %v1026, %v1421
    %v1423 = vpop.f32.mrf.mxu0
    %v1424 = vadd.f32 %v1030, %v1423
    %1425 = vmatprep.mubr.bf16.mxu0 %v1013
    %1426 = vmatmul.mubr.bf16.gmra.mxu0 %v1012
    %v1427 = vpop.f32.mrf.mxu0
    %v1428 = vadd.f32 %v1026, %v1427
    %v1429 = vpop.f32.mrf.mxu0
    %v1430 = vadd.f32 %v1030, %v1429
    %v1431 = vpop.f32.mrf.mxu0
    %v1432 = vadd.f32 %v1026, %v1431
    %v1433 = vpop.f32.mrf.mxu0
    %v1434 = vadd.f32 %v1030, %v1433
    %1435 = vmatprep.mubr.bf16.mxu0 %v1015
    %1436 = vmatmul.mubr.bf16.gmra.mxu0 %v1014
    %v1437 = vpop.f32.mrf.mxu0
    %v1438 = vadd.f32 %v1026, %v1437
    %v1439 = vpop.f32.mrf.mxu0
    %v1440 = vadd.f32 %v1030, %v1439
    %v1441 = vpop.f32.mrf.mxu0
    %v1442 = vadd.f32 %v1026, %v1441
    %v1443 = vpop.f32.mrf.mxu0
    %v1444 = vadd.f32 %v1030, %v1443
    %1445 = vmatprep.mubr.bf16.mxu0 %v1017
    %1446 = vmatmul.mubr.bf16.gmra.mxu0 %v1016
    %v1447 = vpop.f32.mrf.mxu0
    %v1448 = vadd.f32 %v1026, %v1447
    %v1449 = vpop.f32.mrf.mxu0
    %v1450 = vadd.f32 %v1030, %v1449
    %v1451 = vpop.f32.mrf.mxu0
    %v1452 = vadd.f32 %v1026, %v1451
    %v1453 = vpop.f32.mrf.mxu0
    %v1454 = vadd.f32 %v1030, %v1453
    %1455 = vmatprep.mubr.bf16.mxu0 %v1019
    %1456 = vmatmul.mubr.bf16.gmra.mxu0 %v1018
    %v1457 = vpop.f32.mrf.mxu0
    %v1458 = vadd.f32 %v1026, %v1457
    %v1459 = vpop.f32.mrf.mxu0
    %v1460 = vadd.f32 %v1030, %v1459
    %v1461 = vpop.f32.mrf.mxu0
    %v1462 = vadd.f32 %v1026, %v1461
    %v1463 = vpop.f32.mrf.mxu0
    %v1464 = vadd.f32 %v1030, %v1463
    %1465 = vmatprep.mubr.bf16.mxu0 %v1021
    %1466 = vmatmul.mubr.bf16.gmra.mxu0 %v1020
    %v1467 = vpop.f32.mrf.mxu0
    %v1468 = vadd.f32 %v1026, %v1467
    %v1469 = vpop.f32.mrf.mxu0
    %v1470 = vadd.f32 %v1030, %v1469
    %v1471 = vpop.f32.mrf.mxu0
    %v1472 = vadd.f32 %v1026, %v1471
    %v1473 = vpop.f32.mrf.mxu0
    %v1474 = vadd.f32 %v1030, %v1473
    %1475 = vdwg.mxu0
    %1476 = vmatprep.subr.bf16.mxu0 %v1266
    %1477 = vmatpush1.bf16.msra.mxu0 %v1265
    %1478 = vmatprep.subr.bf16.mxu0 %v1262
    %1479 = vmatpush1.bf16.msra.mxu0 %v1261
    %1480 = vmatprep.subr.bf16.mxu0 %v1258
    %1481 = vmatpush1.bf16.msra.mxu0 %v1257
    %1482 = vmatprep.subr.bf16.mxu0 %v1254
    %1483 = vmatpush1.bf16.msra.mxu0 %v1253
    %1484 = vmatprep.subr.bf16.mxu0 %v1250
    %1485 = vmatpush1.bf16.msra.mxu0 %v1249
    %1486 = vmatprep.subr.bf16.mxu0 %v1246
    %1487 = vmatpush1.bf16.msra.mxu0 %v1245
    %1488 = vmatprep.subr.bf16.mxu0 %v1242
    %1489 = vmatpush1.bf16.msra.mxu0 %v1241
    %1490 = vmatprep.subr.bf16.mxu0 %v1238
    %1491 = vmatpush1.bf16.msra.mxu0 %v1237
    %1492 = vmatprep.subr.bf16.mxu0 %v1298
    %1493 = vmatpush2.bf16.msra.mxu0 %v1297
    %1494 = vmatprep.subr.bf16.mxu0 %v1294
    %1495 = vmatpush2.bf16.msra.mxu0 %v1293
    %1496 = vmatprep.subr.bf16.mxu0 %v1290
    %1497 = vmatpush2.bf16.msra.mxu0 %v1289
    %1498 = vmatprep.subr.bf16.mxu0 %v1286
    %1499 = vmatpush2.bf16.msra.mxu0 %v1285
    %1500 = vmatprep.subr.bf16.mxu0 %v1282
    %1501 = vmatpush2.bf16.msra.mxu0 %v1281
    %1502 = vmatprep.subr.bf16.mxu0 %v1278
    %1503 = vmatpush2.bf16.msra.mxu0 %v1277
    %1504 = vmatprep.subr.bf16.mxu0 %v1274
    %1505 = vmatpush2.bf16.msra.mxu0 %v1273
    %1506 = vmatprep.subr.bf16.mxu0 %v1270
    %1507 = vmatpush2.bf16.msra.mxu0 %v1269
    %1508 = vmatprep.mubr.bf16.mxu0 %v1007
    %1509 = vmatmul.mubr.bf16.gmra.mxu0 %v1006
    %v1510 = vpop.f32.mrf.mxu0
    %v1511 = vadd.f32 %v1034, %v1510
    %v1512 = vpop.f32.mrf.mxu0
    %v1513 = vadd.f32 %v1038, %v1512
    %v1514 = vpop.f32.mrf.mxu0
    %v1515 = vadd.f32 %v1034, %v1514
    %v1516 = vpop.f32.mrf.mxu0
    %v1517 = vadd.f32 %v1038, %v1516
    %1518 = vmatprep.mubr.bf16.mxu0 %v1009
    %1519 = vmatmul.mubr.bf16.gmra.mxu0 %v1008
    %v1520 = vpop.f32.mrf.mxu0
    %v1521 = vadd.f32 %v1034, %v1520
    %v1522 = vpop.f32.mrf.mxu0
    %v1523 = vadd.f32 %v1038, %v1522
    %v1524 = vpop.f32.mrf.mxu0
    %v1525 = vadd.f32 %v1034, %v1524
    %v1526 = vpop.f32.mrf.mxu0
    %v1527 = vadd.f32 %v1038, %v1526
    %1528 = vmatprep.mubr.bf16.mxu0 %v1011
    %1529 = vmatmul.mubr.bf16.gmra.mxu0 %v1010
    %v1530 = vpop.f32.mrf.mxu0
    %v1531 = vadd.f32 %v1034, %v1530
    %v1532 = vpop.f32.mrf.mxu0
    %v1533 = vadd.f32 %v1038, %v1532
    %v1534 = vpop.f32.mrf.mxu0
    %v1535 = vadd.f32 %v1034, %v1534
    %v1536 = vpop.f32.mrf.mxu0
    %v1537 = vadd.f32 %v1038, %v1536
    %1538 = vmatprep.mubr.bf16.mxu0 %v1013
    %1539 = vmatmul.mubr.bf16.gmra.mxu0 %v1012
    %v1540 = vpop.f32.mrf.mxu0
    %v1541 = vadd.f32 %v1034, %v1540
    %v1542 = vpop.f32.mrf.mxu0
    %v1543 = vadd.f32 %v1038, %v1542
    %v1544 = vpop.f32.mrf.mxu0
    %v1545 = vadd.f32 %v1034, %v1544
    %v1546 = vpop.f32.mrf.mxu0
    %v1547 = vadd.f32 %v1038, %v1546
    %1548 = vmatprep.mubr.bf16.mxu0 %v1015
    %1549 = vmatmul.mubr.bf16.gmra.mxu0 %v1014
    %v1550 = vpop.f32.mrf.mxu0
    %v1551 = vadd.f32 %v1034, %v1550
    %v1552 = vpop.f32.mrf.mxu0
    %v1553 = vadd.f32 %v1038, %v1552
    %v1554 = vpop.f32.mrf.mxu0
    %v1555 = vadd.f32 %v1034, %v1554
    %v1556 = vpop.f32.mrf.mxu0
    %v1557 = vadd.f32 %v1038, %v1556
    %1558 = vmatprep.mubr.bf16.mxu0 %v1017
    %1559 = vmatmul.mubr.bf16.gmra.mxu0 %v1016
    %v1560 = vpop.f32.mrf.mxu0
    %v1561 = vadd.f32 %v1034, %v1560
    %v1562 = vpop.f32.mrf.mxu0
    %v1563 = vadd.f32 %v1038, %v1562
    %v1564 = vpop.f32.mrf.mxu0
    %v1565 = vadd.f32 %v1034, %v1564
    %v1566 = vpop.f32.mrf.mxu0
    %v1567 = vadd.f32 %v1038, %v1566
    %1568 = vmatprep.mubr.bf16.mxu0 %v1019
    %1569 = vmatmul.mubr.bf16.gmra.mxu0 %v1018
    %v1570 = vpop.f32.mrf.mxu0
    %v1571 = vadd.f32 %v1034, %v1570
    %v1572 = vpop.f32.mrf.mxu0
    %v1573 = vadd.f32 %v1038, %v1572
    %v1574 = vpop.f32.mrf.mxu0
    %v1575 = vadd.f32 %v1034, %v1574
    %v1576 = vpop.f32.mrf.mxu0
    %v1577 = vadd.f32 %v1038, %v1576
    %1578 = vmatprep.mubr.bf16.mxu0 %v1021
    %1579 = vmatmul.mubr.bf16.gmra.mxu0 %v1020
    %v1580 = vpop.f32.mrf.mxu0
    %v1581 = vadd.f32 %v1034, %v1580
    %v1582 = vpop.f32.mrf.mxu0
    %v1583 = vadd.f32 %v1038, %v1582
    %v1584 = vpop.f32.mrf.mxu0
    %v1585 = vadd.f32 %v1034, %v1584
    %v1586 = vpop.f32.mrf.mxu0
    %v1587 = vadd.f32 %v1038, %v1586
    %1588 = vdwg.mxu0
    %v1589 = vmul.f32 %v1398, %v1398
    %v1590 = vmul.f32 %v1400, %v1400
    %v1591 = vmul.f32 %v1511, %v1511
    %v1592 = vmul.f32 %v1513, %v1513
    %v1593 = vmul.f32 %v1402, %v1402
    %v1594 = vmul.f32 %v1404, %v1404
    %v1595 = vmul.f32 %v1515, %v1515
    %v1596 = vmul.f32 %v1517, %v1517
    %v1597 = vmul.f32 %v1408, %v1408
    %v1598 = vmul.f32 %v1410, %v1410
    %v1599 = vmul.f32 %v1521, %v1521
    %v1600 = vmul.f32 %v1523, %v1523
    %v1601 = vmul.f32 %v1412, %v1412
    %v1602 = vmul.f32 %v1414, %v1414
    %v1603 = vmul.f32 %v1525, %v1525
    %v1604 = vmul.f32 %v1527, %v1527
    %v1605 = vmul.f32 %v1418, %v1418
    %v1606 = vmul.f32 %v1420, %v1420
    %v1607 = vmul.f32 %v1531, %v1531
    %v1608 = vmul.f32 %v1533, %v1533
    %v1609 = vmul.f32 %v1422, %v1422
    %v1610 = vmul.f32 %v1424, %v1424
    %v1611 = vmul.f32 %v1535, %v1535
    %v1612 = vmul.f32 %v1537, %v1537
    %v1613 = vmul.f32 %v1428, %v1428
    %v1614 = vmul.f32 %v1430, %v1430
    %v1615 = vmul.f32 %v1541, %v1541
    %v1616 = vmul.f32 %v1543, %v1543
    %v1617 = vmul.f32 %v1432, %v1432
    %v1618 = vmul.f32 %v1434, %v1434
    %v1619 = vmul.f32 %v1545, %v1545
    %v1620 = vmul.f32 %v1547, %v1547
    %v1621 = vmul.f32 %v1438, %v1438
    %v1622 = vmul.f32 %v1440, %v1440
    %v1623 = vmul.f32 %v1551, %v1551
    %v1624 = vmul.f32 %v1553, %v1553
    %v1625 = vmul.f32 %v1442, %v1442
    %v1626 = vmul.f32 %v1444, %v1444
    %v1627 = vmul.f32 %v1555, %v1555
    %v1628 = vmul.f32 %v1557, %v1557
    %v1629 = vmul.f32 %v1448, %v1448
    %v1630 = vmul.f32 %v1450, %v1450
    %v1631 = vmul.f32 %v1561, %v1561
    %v1632 = vmul.f32 %v1563, %v1563
    %v1633 = vmul.f32 %v1452, %v1452
    %v1634 = vmul.f32 %v1454, %v1454
    %v1635 = vmul.f32 %v1565, %v1565
    %v1636 = vmul.f32 %v1567, %v1567
    %v1637 = vmul.f32 %v1458, %v1458
    %v1638 = vmul.f32 %v1460, %v1460
    %v1639 = vmul.f32 %v1571, %v1571
    %v1640 = vmul.f32 %v1573, %v1573
    %v1641 = vmul.f32 %v1462, %v1462
    %v1642 = vmul.f32 %v1464, %v1464
    %v1643 = vmul.f32 %v1575, %v1575
    %v1644 = vmul.f32 %v1577, %v1577
    %v1645 = vmul.f32 %v1468, %v1468
    %v1646 = vmul.f32 %v1470, %v1470
    %v1647 = vmul.f32 %v1581, %v1581
    %v1648 = vmul.f32 %v1583, %v1583
    %v1649 = vmul.f32 %v1472, %v1472
    %v1650 = vmul.f32 %v1474, %v1474
    %v1651 = vmul.f32 %v1585, %v1585
    %v1652 = vmul.f32 %v1587, %v1587
    %v1653 = vadd.f32 %v1589, %v1590
    %v1654 = vadd.f32 %v1653, %v1591
    %v1655 = vadd.f32 %v1654, %v1592
    %1656 = vadd.xlane.f32.xlu0 %v1655
    %v1657 = vpop.xlane.xlu0 %1656
    %v1658 = vadd.f32 %v1593, %v1594
    %v1659 = vadd.f32 %v1658, %v1595
    %v1660 = vadd.f32 %v1659, %v1596
    %1661 = vadd.xlane.f32.xlu0 %v1660
    %v1662 = vpop.xlane.xlu0 %1661
    %v1663 = vadd.f32 %v1597, %v1598
    %v1664 = vadd.f32 %v1663, %v1599
    %v1665 = vadd.f32 %v1664, %v1600
    %1666 = vadd.xlane.f32.xlu0 %v1665
    %v1667 = vpop.xlane.xlu0 %1666
    %v1668 = vadd.f32 %v1601, %v1602
    %v1669 = vadd.f32 %v1668, %v1603
    %v1670 = vadd.f32 %v1669, %v1604
    %1671 = vadd.xlane.f32.xlu0 %v1670
    %v1672 = vpop.xlane.xlu0 %1671
    %v1673 = vadd.f32 %v1605, %v1606
    %v1674 = vadd.f32 %v1673, %v1607
    %v1675 = vadd.f32 %v1674, %v1608
    %1676 = vadd.xlane.f32.xlu0 %v1675
    %v1677 = vpop.xlane.xlu0 %1676
    %v1678 = vadd.f32 %v1609, %v1610
    %v1679 = vadd.f32 %v1678, %v1611
    %v1680 = vadd.f32 %v1679, %v1612
    %1681 = vadd.xlane.f32.xlu0 %v1680
    %v1682 = vpop.xlane.xlu0 %1681
    %v1683 = vadd.f32 %v1613, %v1614
    %v1684 = vadd.f32 %v1683, %v1615
    %v1685 = vadd.f32 %v1684, %v1616
    %1686 = vadd.xlane.f32.xlu0 %v1685
    %v1687 = vpop.xlane.xlu0 %1686
    %v1688 = vadd.f32 %v1617, %v1618
    %v1689 = vadd.f32 %v1688, %v1619
    %v1690 = vadd.f32 %v1689, %v1620
    %1691 = vadd.xlane.f32.xlu0 %v1690
    %v1692 = vpop.xlane.xlu0 %1691
    %v1693 = vadd.f32 %v1621, %v1622
    %v1694 = vadd.f32 %v1693, %v1623
    %v1695 = vadd.f32 %v1694, %v1624
    %1696 = vadd.xlane.f32.xlu0 %v1695
    %v1697 = vpop.xlane.xlu0 %1696
    %v1698 = vadd.f32 %v1625, %v1626
    %v1699 = vadd.f32 %v1698, %v1627
    %v1700 = vadd.f32 %v1699, %v1628
    %1701 = vadd.xlane.f32.xlu0 %v1700
    %v1702 = vpop.xlane.xlu0 %1701
    %v1703 = vadd.f32 %v1629, %v1630
    %v1704 = vadd.f32 %v1703, %v1631
    %v1705 = vadd.f32 %v1704, %v1632
    %1706 = vadd.xlane.f32.xlu0 %v1705
    %v1707 = vpop.xlane.xlu0 %1706
    %v1708 = vadd.f32 %v1633, %v1634
    %v1709 = vadd.f32 %v1708, %v1635
    %v1710 = vadd.f32 %v1709, %v1636
    %1711 = vadd.xlane.f32.xlu0 %v1710
    %v1712 = vpop.xlane.xlu0 %1711
    %v1713 = vadd.f32 %v1637, %v1638
    %v1714 = vadd.f32 %v1713, %v1639
    %v1715 = vadd.f32 %v1714, %v1640
    %1716 = vadd.xlane.f32.xlu0 %v1715
    %v1717 = vpop.xlane.xlu0 %1716
    %v1718 = vadd.f32 %v1641, %v1642
    %v1719 = vadd.f32 %v1718, %v1643
    %v1720 = vadd.f32 %v1719, %v1644
    %1721 = vadd.xlane.f32.xlu0 %v1720
    %v1722 = vpop.xlane.xlu0 %1721
    %v1723 = vadd.f32 %v1645, %v1646
    %v1724 = vadd.f32 %v1723, %v1647
    %v1725 = vadd.f32 %v1724, %v1648
    %1726 = vadd.xlane.f32.xlu0 %v1725
    %v1727 = vpop.xlane.xlu0 %1726
    %v1728 = vadd.f32 %v1649, %v1650
    %v1729 = vadd.f32 %v1728, %v1651
    %v1730 = vadd.f32 %v1729, %v1652
    %1731 = vadd.xlane.f32.xlu0 %v1730
    %v1732 = vpop.xlane.xlu0 %1731
    %v1733 = vadd.f32 %v1657, 1e-12
    %v1734 = vadd.f32 %v1662, 1e-12
    %v1735 = vadd.f32 %v1667, 1e-12
    %v1736 = vadd.f32 %v1672, 1e-12
    %v1737 = vadd.f32 %v1677, 1e-12
    %v1738 = vadd.f32 %v1682, 1e-12
    %v1739 = vadd.f32 %v1687, 1e-12
    %v1740 = vadd.f32 %v1692, 1e-12
    %v1741 = vadd.f32 %v1697, 1e-12
    %v1742 = vadd.f32 %v1702, 1e-12
    %v1743 = vadd.f32 %v1707, 1e-12
    %v1744 = vadd.f32 %v1712, 1e-12
    %v1745 = vadd.f32 %v1717, 1e-12
    %v1746 = vadd.f32 %v1722, 1e-12
    %v1747 = vadd.f32 %v1727, 1e-12
    %v1748 = vadd.f32 %v1732, 1e-12
    %v1749 = vrsqrt.pop %v1733
    %v1750 = vrsqrt.pop %v1734
    %v1751 = vrsqrt.pop %v1735
    %v1752 = vrsqrt.pop %v1736
    %v1753 = vrsqrt.pop %v1737
    %v1754 = vrsqrt.pop %v1738
    %v1755 = vrsqrt.pop %v1739
    %v1756 = vrsqrt.pop %v1740
    %v1757 = vrsqrt.pop %v1741
    %v1758 = vrsqrt.pop %v1742
    %v1759 = vrsqrt.pop %v1743
    %v1760 = vrsqrt.pop %v1744
    %v1761 = vrsqrt.pop %v1745
    %v1762 = vrsqrt.pop %v1746
    %v1763 = vrsqrt.pop %v1747
    %v1764 = vrsqrt.pop %v1748
    %v1765 = vmul.f32 %v1398, %v1749
    %v1766 = vmul.f32 %v1400, %v1749
    %v1767 = vmul.f32 %v1511, %v1749
    %v1768 = vmul.f32 %v1513, %v1749
    %v1769 = vmul.f32 %v1402, %v1750
    %v1770 = vmul.f32 %v1404, %v1750
    %v1771 = vmul.f32 %v1515, %v1750
    %v1772 = vmul.f32 %v1517, %v1750
    %v1773 = vmul.f32 %v1408, %v1751
    %v1774 = vmul.f32 %v1410, %v1751
    %v1775 = vmul.f32 %v1521, %v1751
    %v1776 = vmul.f32 %v1523, %v1751
    %v1777 = vmul.f32 %v1412, %v1752
    %v1778 = vmul.f32 %v1414, %v1752
    %v1779 = vmul.f32 %v1525, %v1752
    %v1780 = vmul.f32 %v1527, %v1752
    %v1781 = vmul.f32 %v1418, %v1753
    %v1782 = vmul.f32 %v1420, %v1753
    %v1783 = vmul.f32 %v1531, %v1753
    %v1784 = vmul.f32 %v1533, %v1753
    %v1785 = vmul.f32 %v1422, %v1754
    %v1786 = vmul.f32 %v1424, %v1754
    %v1787 = vmul.f32 %v1535, %v1754
    %v1788 = vmul.f32 %v1537, %v1754
    %v1789 = vmul.f32 %v1428, %v1755
    %v1790 = vmul.f32 %v1430, %v1755
    %v1791 = vmul.f32 %v1541, %v1755
    %v1792 = vmul.f32 %v1543, %v1755
    %v1793 = vmul.f32 %v1432, %v1756
    %v1794 = vmul.f32 %v1434, %v1756
    %v1795 = vmul.f32 %v1545, %v1756
    %v1796 = vmul.f32 %v1547, %v1756
    %v1797 = vmul.f32 %v1438, %v1757
    %v1798 = vmul.f32 %v1440, %v1757
    %v1799 = vmul.f32 %v1551, %v1757
    %v1800 = vmul.f32 %v1553, %v1757
    %v1801 = vmul.f32 %v1442, %v1758
    %v1802 = vmul.f32 %v1444, %v1758
    %v1803 = vmul.f32 %v1555, %v1758
    %v1804 = vmul.f32 %v1557, %v1758
    %v1805 = vmul.f32 %v1448, %v1759
    %v1806 = vmul.f32 %v1450, %v1759
    %v1807 = vmul.f32 %v1561, %v1759
    %v1808 = vmul.f32 %v1563, %v1759
    %v1809 = vmul.f32 %v1452, %v1760
    %v1810 = vmul.f32 %v1454, %v1760
    %v1811 = vmul.f32 %v1565, %v1760
    %v1812 = vmul.f32 %v1567, %v1760
    %v1813 = vmul.f32 %v1458, %v1761
    %v1814 = vmul.f32 %v1460, %v1761
    %v1815 = vmul.f32 %v1571, %v1761
    %v1816 = vmul.f32 %v1573, %v1761
    %v1817 = vmul.f32 %v1462, %v1762
    %v1818 = vmul.f32 %v1464, %v1762
    %v1819 = vmul.f32 %v1575, %v1762
    %v1820 = vmul.f32 %v1577, %v1762
    %v1821 = vmul.f32 %v1468, %v1763
    %v1822 = vmul.f32 %v1470, %v1763
    %v1823 = vmul.f32 %v1581, %v1763
    %v1824 = vmul.f32 %v1583, %v1763
    %v1825 = vmul.f32 %v1472, %v1764
    %v1826 = vmul.f32 %v1474, %v1764
    %v1827 = vmul.f32 %v1585, %v1764
    %v1828 = vmul.f32 %v1587, %v1764
    %v1829 = vstv %s254
    %v1830 = vmul.f32 %v1765, %v1829
    %v1831 = vmul.f32 %v1766, %v1829
    %v1832 = vmul.f32 %v1767, %v1829
    %v1833 = vmul.f32 %v1768, %v1829
    %v1834 = vmul.f32 %v1769, %v1829
    %v1835 = vmul.f32 %v1770, %v1829
    %v1836 = vmul.f32 %v1771, %v1829
    %v1837 = vmul.f32 %v1772, %v1829
    %v1838 = vmul.f32 %v1773, %v1829
    %v1839 = vmul.f32 %v1774, %v1829
    %v1840 = vmul.f32 %v1775, %v1829
    %v1841 = vmul.f32 %v1776, %v1829
    %v1842 = vmul.f32 %v1777, %v1829
    %v1843 = vmul.f32 %v1778, %v1829
    %v1844 = vmul.f32 %v1779, %v1829
    %v1845 = vmul.f32 %v1780, %v1829
    %v1846 = vmul.f32 %v1781, %v1829
    %v1847 = vmul.f32 %v1782, %v1829
    %v1848 = vmul.f32 %v1783, %v1829
    %v1849 = vmul.f32 %v1784, %v1829
    %v1850 = vmul.f32 %v1785, %v1829
    %v1851 = vmul.f32 %v1786, %v1829
    %v1852 = vmul.f32 %v1787, %v1829
    %v1853 = vmul.f32 %v1788, %v1829
    %v1854 = vmul.f32 %v1789, %v1829
    %v1855 = vmul.f32 %v1790, %v1829
    %v1856 = vmul.f32 %v1791, %v1829
    %v1857 = vmul.f32 %v1792, %v1829
    %v1858 = vmul.f32 %v1793, %v1829
    %v1859 = vmul.f32 %v1794, %v1829
    %v1860 = vmul.f32 %v1795, %v1829
    %v1861 = vmul.f32 %v1796, %v1829
    %v1862 = vmul.f32 %v1797, %v1829
    %v1863 = vmul.f32 %v1798, %v1829
    %v1864 = vmul.f32 %v1799, %v1829
    %v1865 = vmul.f32 %v1800, %v1829
    %v1866 = vmul.f32 %v1801, %v1829
    %v1867 = vmul.f32 %v1802, %v1829
    %v1868 = vmul.f32 %v1803, %v1829
    %v1869 = vmul.f32 %v1804, %v1829
    %v1870 = vmul.f32 %v1805, %v1829
    %v1871 = vmul.f32 %v1806, %v1829
    %v1872 = vmul.f32 %v1807, %v1829
    %v1873 = vmul.f32 %v1808, %v1829
    %v1874 = vmul.f32 %v1809, %v1829
    %v1875 = vmul.f32 %v1810, %v1829
    %v1876 = vmul.f32 %v1811, %v1829
    %v1877 = vmul.f32 %v1812, %v1829
    %v1878 = vmul.f32 %v1813, %v1829
    %v1879 = vmul.f32 %v1814, %v1829
    %v1880 = vmul.f32 %v1815, %v1829
    %v1881 = vmul.f32 %v1816, %v1829
    %v1882 = vmul.f32 %v1817, %v1829
    %v1883 = vmul.f32 %v1818, %v1829
    %v1884 = vmul.f32 %v1819, %v1829
    %v1885 = vmul.f32 %v1820, %v1829
    %v1886 = vmul.f32 %v1821, %v1829
    %v1887 = vmul.f32 %v1822, %v1829
    %v1888 = vmul.f32 %v1823, %v1829
    %v1889 = vmul.f32 %v1824, %v1829
    %v1890 = vmul.f32 %v1825, %v1829
    %v1891 = vmul.f32 %v1826, %v1829
    %v1892 = vmul.f32 %v1827, %v1829
    %v1893 = vmul.f32 %v1828, %v1829
    %1894 = vst [vmem:[#allocation12] sm:$0xff] %v1830
    %1895 = vst [vmem:[#allocation12 + $0x8] sm:$0xff] %v1831
    %1896 = vst [vmem:[#allocation12 + $0x10] sm:$0xff] %v1832
    %1897 = vst [vmem:[#allocation12 + $0x18] sm:$0xff] %v1833
    %1898 = vst [vmem:[#allocation12 + $0x20] sm:$0xff] %v1834
    %1899 = vst [vmem:[#allocation12 + $0x28] sm:$0xff] %v1835
    %1900 = vst [vmem:[#allocation12 + $0x30] sm:$0xff] %v1836
    %1901 = vst [vmem:[#allocation12 + $0x38] sm:$0xff] %v1837
    %1902 = vst [vmem:[#allocation12 + $0x40] sm:$0xff] %v1838
    %1903 = vst [vmem:[#allocation12 + $0x48] sm:$0xff] %v1839
    %1904 = vst [vmem:[#allocation12 + $0x50] sm:$0xff] %v1840
    %1905 = vst [vmem:[#allocation12 + $0x58] sm:$0xff] %v1841
    %1906 = vst [vmem:[#allocation12 + $0x60] sm:$0xff] %v1842
    %1907 = vst [vmem:[#allocation12 + $0x68] sm:$0xff] %v1843
    %1908 = vst [vmem:[#allocation12 + $0x70] sm:$0xff] %v1844
    %1909 = vst [vmem:[#allocation12 + $0x78] sm:$0xff] %v1845
    %1910 = vst [vmem:[#allocation12 + $0x80] sm:$0xff] %v1846
    %1911 = vst [vmem:[#allocation12 + $0x88] sm:$0xff] %v1847
    %1912 = vst [vmem:[#allocation12 + $0x90] sm:$0xff] %v1848
    %1913 = vst [vmem:[#allocation12 + $0x98] sm:$0xff] %v1849
    %1914 = vst [vmem:[#allocation12 + $0xa0] sm:$0xff] %v1850
    %1915 = vst [vmem:[#allocation12 + $0xa8] sm:$0xff] %v1851
    %1916 = vst [vmem:[#allocation12 + $0xb0] sm:$0xff] %v1852
    %1917 = vst [vmem:[#allocation12 + $0xb8] sm:$0xff] %v1853
    %1918 = vst [vmem:[#allocation12 + $0xc0] sm:$0xff] %v1854
    %1919 = vst [vmem:[#allocation12 + $0xc8] sm:$0xff] %v1855
    %1920 = vst [vmem:[#allocation12 + $0xd0] sm:$0xff] %v1856
    %1921 = vst [vmem:[#allocation12 + $0xd8] sm:$0xff] %v1857
    %1922 = vst [vmem:[#allocation12 + $0xe0] sm:$0xff] %v1858
    %1923 = vst [vmem:[#allocation12 + $0xe8] sm:$0xff] %v1859
    %1924 = vst [vmem:[#allocation12 + $0xf0] sm:$0xff] %v1860
    %1925 = vst [vmem:[#allocation12 + $0xf8] sm:$0xff] %v1861
    %1926 = vst [vmem:[#allocation12 + $0x100] sm:$0xff] %v1862
    %1927 = vst [vmem:[#allocation12 + $0x108] sm:$0xff] %v1863
    %1928 = vst [vmem:[#allocation12 + $0x110] sm:$0xff] %v1864
    %1929 = vst [vmem:[#allocation12 + $0x118] sm:$0xff] %v1865
    %1930 = vst [vmem:[#allocation12 + $0x120] sm:$0xff] %v1866
    %1931 = vst [vmem:[#allocation12 + $0x128] sm:$0xff] %v1867
    %1932 = vst [vmem:[#allocation12 + $0x130] sm:$0xff] %v1868
    %1933 = vst [vmem:[#allocation12 + $0x138] sm:$0xff] %v1869
    %1934 = vst [vmem:[#allocation12 + $0x140] sm:$0xff] %v1870
    %1935 = vst [vmem:[#allocation12 + $0x148] sm:$0xff] %v1871
    %1936 = vst [vmem:[#allocation12 + $0x150] sm:$0xff] %v1872
    %1937 = vst [vmem:[#allocation12 + $0x158] sm:$0xff] %v1873
    %1938 = vst [vmem:[#allocation12 + $0x160] sm:$0xff] %v1874
    %1939 = vst [vmem:[#allocation12 + $0x168] sm:$0xff] %v1875
    %1940 = vst [vmem:[#allocation12 + $0x170] sm:$0xff] %v1876
    %1941 = vst [vmem:[#allocation12 + $0x178] sm:$0xff] %v1877
    %1942 = vst [vmem:[#allocation12 + $0x180] sm:$0xff] %v1878
    %1943 = vst [vmem:[#allocation12 + $0x188] sm:$0xff] %v1879
    %1944 = vst [vmem:[#allocation12 + $0x190] sm:$0xff] %v1880
    %1945 = vst [vmem:[#allocation12 + $0x198] sm:$0xff] %v1881
    %1946 = vst [vmem:[#allocation12 + $0x1a0] sm:$0xff] %v1882
    %1947 = vst [vmem:[#allocation12 + $0x1a8] sm:$0xff] %v1883
    %1948 = vst [vmem:[#allocation12 + $0x1b0] sm:$0xff] %v1884
    %1949 = vst [vmem:[#allocation12 + $0x1b8] sm:$0xff] %v1885
    %1950 = vst [vmem:[#allocation12 + $0x1c0] sm:$0xff] %v1886
    %1951 = vst [vmem:[#allocation12 + $0x1c8] sm:$0xff] %v1887
    %1952 = vst [vmem:[#allocation12 + $0x1d0] sm:$0xff] %v1888
    %1953 = vst [vmem:[#allocation12 + $0x1d8] sm:$0xff] %v1889
    %1954 = vst [vmem:[#allocation12 + $0x1e0] sm:$0xff] %v1890
    %1955 = vst [vmem:[#allocation12 + $0x1e8] sm:$0xff] %v1891
    %1956 = vst [vmem:[#allocation12 + $0x1f0] sm:$0xff] %v1892
    %1957 = vst [vmem:[#allocation12 + $0x1f8] sm:$0xff] %v1893
    // Predicated region
    $region62: #{tpu_custom_call.1} parent=1 // pred_check
      _
    $region63: #{tpu_custom_call.1} parent=1 // pred_check_branch
      %1959 = sbr.rel (0) target = $region65
    $region64: #{tpu_custom_call.1} parent=1 // pred_region
      %s1961 = ssub.s32 8192, 8192
      %1962 = vsyncadd [#allocation5], %s1961
      %s1963 = sshll.u32 [#allocation12], 4
      %s1964 = int_to_ptr.vmem [resolvable:$true] %s1963
      %1969 = dma.vmem_to_hbm [thread:$0]  %s1964, 8192, %s10, [#allocation5], 512, 512, 32
    $region65: #{tpu_custom_call.1} parent=1 // pred_fallthru
      _
    // Predicated region
    $region66: #{tpu_custom_call.1} parent=1 // pred_check
      _
    $region67: #{tpu_custom_call.1} parent=1 // pred_check_branch
      %1971 = sbr.rel (0) target = $region69
    $region68: #{tpu_custom_call.1} parent=1 // pred_region
      %1972 = dma.done [#allocation5], 8192
    $region69: #{tpu_custom_call.1} parent=1 // pred_fallthru
      _
    %1973 = vsyncpa [#allocation4], 1
    %1974 = vsyncpa [#allocation7], 1
    %1975 = vsyncpa [#allocation10], 1
    %1976 = vsyncpa [#allocation5], 1

</llo_original>
